<compile_context>
chip_gen: v5e
topology: v5e:2x2
jax: 0.10.0
libtpu: 0.0.40
codegen_flags: <defaults>
</compile_context>

<pallas_src>
import jax
import jax.numpy as jnp
from jax.experimental import pallas as pl
from jax.experimental.pallas import tpu as pltpu

# Problem size (BasicBlock(4, 4) on a 2x4x16x16 input).
N, C, H, W = 2, 4, 16, 16
O = C                      # residual add requires in_channel == out_channel
K = 5
PAD = 2
EPS = 1e-5

NC = N * C                 # 8   -> sublane axis (full f32 vreg height)
NO = N * O                 # 8
HW = H * W                 # 256 -> lane axis (2 full 128-lane tiles)
NTAPS = K * K              # 25
KDIM = NTAPS * NC          # 200 -> im2col contraction dimension

assert C == O


def basic_block_kernel(x_ref, w_ref, mask_ref, bn_ref, out_ref, col_ref):
    # x_ref:    (NC, HW)       f32  row n*C+c = image n, channel c, flat HW
    # w_ref:    (2, NO, KDIM)  f32  im2col weights for conv1/conv2, block-
    #                               diagonal over the image axis per tap
    # mask_ref: (NTAPS, HW)    f32  multiplicative halo masks per tap
    # bn_ref:   (NC, 4)        f32  columns [g1, be1, g2, be2]
    # out_ref:  (NC, HW)       f32
    # col_ref:  (KDIM, HW)     f32  VMEM im2col scratch, reused by both convs
    x = x_ref[...]

    def conv5x5(a, w):
        # Build the im2col slab: lane roll (XLU) + one mask multiply per tap,
        # stored as aligned 8-row slabs.  Lane wrap / cross-row contamination
        # is zeroed by the halo mask (destination (h,w) with h+dh or w+dw
        # outside the image), which is exactly zero padding.
        tap = 0
        for kh in range(K):
            dh = kh - PAD
            for kw in range(K):
                dw = kw - PAD
                d = dh * W + dw
                shifted = a if d == 0 else pltpu.roll(a, (-d) % HW, axis=1)
                if dh == 0 and dw == 0:          # center tap: mask is all ones
                    col_ref[tap * NC:(tap + 1) * NC, :] = shifted
                else:
                    col_ref[tap * NC:(tap + 1) * NC, :] = (
                        shifted * mask_ref[tap:tap + 1, :])
                tap += 1
        # Single MXU contraction per conv: (NO, KDIM) x (KDIM, HW).
        return jnp.dot(w, col_ref[...], preferred_element_type=jnp.float32)

    def bn_relu(a, g, be):
        # Train-mode BatchNorm2d (biased batch variance) fused into one
        # per-channel scale/shift, then ReLU.
        inv = 1.0 / (N * H * W)
        s = jnp.sum(a, axis=1, keepdims=True)          # (NC, 1) per-row sums
        sq = jnp.sum(a * a, axis=1, keepdims=True)
        # Rows c and C+c hold the same channel of the two images; a sublane
        # roll by C combines them into full per-channel batch statistics.
        s = s + pltpu.roll(s, C, axis=0)
        sq = sq + pltpu.roll(sq, C, axis=0)
        mean = s * inv
        var = jnp.maximum(sq * inv - mean * mean, 0.0)
        scale = g * jax.lax.rsqrt(var + EPS)           # (NC, 1)
        shift = be - mean * scale                      # (NC, 1)
        return jnp.maximum(a * scale + shift, 0.0)     # 3 wide VALU ops

    g1 = bn_ref[:, 0:1]
    be1 = bn_ref[:, 1:2]
    g2 = bn_ref[:, 2:3]
    be2 = bn_ref[:, 3:4]

    x2 = bn_relu(conv5x5(x, w_ref[0]), g1, be1)
    x3 = bn_relu(conv5x5(x2, w_ref[1]), g2, be2)
    out_ref[...] = x3 + x                              # residual add, lane-dense


def _pack_weight(w_hwio):
    """(K, K, C, O) HWIO conv weight -> (N*O, K*K*N*C) im2col weight.

    Per tap t the (N*O, N*C) block is kron(I_N, W_t) (block-diagonal over the
    image axis), matching the (image, channel) row packing of the im2col slab.
    """
    w_toc = jnp.transpose(w_hwio.astype(jnp.float32), (0, 1, 3, 2))
    w_toc = w_toc.reshape(NTAPS, O, C)                       # per-tap (O, C)
    eye = jnp.eye(N, dtype=jnp.float32)
    blocks = jnp.einsum("ij,toc->iotjc", eye, w_toc)         # (N, O, T, N, C)
    return blocks.reshape(NO, KDIM)


def _halo_masks():
    """(NTAPS, HW) f32 masks: 1.0 where (h+dh, w+dw) is inside the image."""
    lane = jnp.arange(HW, dtype=jnp.int32)
    hh = lane // W
    ww = lane % W
    rows = []
    for kh in range(K):
        dh = kh - PAD
        for kw in range(K):
            dw = kw - PAD
            valid = ((hh + dh >= 0) & (hh + dh < H) &
                     (ww + dw >= 0) & (ww + dw < W))
            rows.append(valid.astype(jnp.float32))
    return jnp.stack(rows)


@jax.jit
def basic_block(x_nchw, w1, b1, g1, be1, w2, b2, g2, be2):
    """Forward of BasicBlock.  w1/w2 are HWIO (K, K, C, O) conv weights."""
    # Conv biases are cancelled exactly by the batch-mean subtraction of the
    # train-mode BatchNorm that immediately follows each conv.
    del b1, b2

    # NCHW -> (N*C, H*W): a pure reshape (no transpose needed).
    x_flat = x_nchw.astype(jnp.float32).reshape(NC, HW)

    w_packed = jnp.stack([_pack_weight(w1), _pack_weight(w2)])   # (2, NO, KDIM)
    masks = _halo_masks()                                        # constant-folded
    bn = jnp.tile(
        jnp.stack([g1, be1, g2, be2], axis=1).astype(jnp.float32), (N, 1))  # (NC,4)

    vmem = pl.BlockSpec(memory_space=pltpu.MemorySpace.VMEM)
    out_flat = pl.pallas_call(
        basic_block_kernel,
        out_shape=jax.ShapeDtypeStruct((NO, HW), jnp.float32),
        in_specs=[vmem, vmem, vmem, vmem],
        out_specs=vmem,
        scratch_shapes=[pltpu.VMEM((KDIM, HW), jnp.float32)],
    )(x_flat, w_packed, masks, bn)

    # (N*O, H*W) -> NCHW (pure reshape).
    return out_flat.reshape(N, O, H, W)


def ref_forward(x_nchw, w1, b1, g1, be1, w2, b2, g2, be2):
    """Pure-JAX reference (NHWC conv + train-mode BN + ReLU + residual)."""
    x = jnp.transpose(x_nchw, (0, 2, 3, 1)).astype(jnp.float32)

    def conv(a, w, b):
        y = jax.lax.conv_general_dilated(
            a, w, window_strides=(1, 1), padding=[(PAD, PAD), (PAD, PAD)],
            dimension_numbers=("NHWC", "HWIO", "NHWC"))
        return y + b.reshape(1, 1, 1, -1)

    def bn(a, g, be):
        m = jnp.mean(a, axis=(0, 1, 2), keepdims=True)
        v = jnp.mean((a - m) ** 2, axis=(0, 1, 2), keepdims=True)
        return ((a - m) * jax.lax.rsqrt(v + EPS) * g.reshape(1, 1, 1, -1)
                + be.reshape(1, 1, 1, -1))

    x2 = jax.nn.relu(bn(conv(x, w1, b1), g1, be1))
    x3 = jax.nn.relu(bn(conv(x2, w2, b2), g2, be2))
    return jnp.transpose(x3 + x, (0, 3, 1, 2))


if __name__ == "__main__":
    key = jax.random.PRNGKey(0)
    kx, kw1, kb1, kw2, kb2 = jax.random.split(key, 5)

    x = jax.random.normal(kx, (N, C, H, W), jnp.float32)

    # Deterministic synthetic parameters (HWIO conv weight layout).
    fan_in1 = C * K * K
    w1 = jax.random.uniform(kw1, (K, K, C, O), jnp.float32,
                            minval=-1.0, maxval=1.0) / jnp.sqrt(fan_in1)
    b1 = jax.random.uniform(kb1, (O,), jnp.float32, -0.1, 0.1)
    fan_in2 = O * K * K
    w2 = jax.random.uniform(kw2, (K, K, O, O), jnp.float32,
                            minval=-1.0, maxval=1.0) / jnp.sqrt(fan_in2)
    b2 = jax.random.uniform(kb2, (O,), jnp.float32, -0.1, 0.1)

    g1 = jnp.ones((O,), jnp.float32)
    be1 = jnp.zeros((O,), jnp.float32)
    g2 = jnp.ones((O,), jnp.float32)
    be2 = jnp.zeros((O,), jnp.float32)

    out = jax.block_until_ready(basic_block(x, w1, b1, g1, be1, w2, b2, g2, be2))
    ref = jax.block_until_ready(ref_forward(x, w1, b1, g1, be1, w2, b2, g2, be2))

    assert out.shape == (N, C, H, W)
    assert bool(jnp.all(jnp.isfinite(out)))
    err = float(jnp.max(jnp.abs(out - ref)))
    assert jnp.allclose(out, ref, rtol=1e-3, atol=1e-3), f"max abs err {err}"

    print("KERNEL_OK")
</pallas_src>

<mosaic_0001>
module attributes {stable_mosaic.version = 11 : i64} {
  func.func @basic_block_kernel(%arg0: memref<8x256xf32, #tpu.memory_space<vmem>>, %arg1: memref<2x8x200xf32, #tpu.memory_space<vmem>>, %arg2: memref<25x256xf32, #tpu.memory_space<vmem>>, %arg3: memref<8x4xf32, #tpu.memory_space<vmem>>, %arg4: memref<8x256xf32, #tpu.memory_space<vmem>>, %arg5: memref<200x256xf32, #tpu.memory_space<vmem>>) attributes {dimension_semantics = [], scalar_prefetch = 0 : i64, scratch_operands = 1 : i64, tpu.core_type = #tpu.core_type<tc>} {
    %c0 = arith.constant 0 : index
    %c0_0 = arith.constant 0 : index
    %0 = vector.load %arg0[%c0, %c0_0] : memref<8x256xf32, #tpu.memory_space<vmem>>, vector<8x256xf32>
    %c0_1 = arith.constant 0 : index
    %c0_2 = arith.constant 0 : index
    %1 = vector.load %arg3[%c0_1, %c0_2] : memref<8x4xf32, #tpu.memory_space<vmem>>, vector<8x1xf32>
    %c0_3 = arith.constant 0 : index
    %c1 = arith.constant 1 : index
    %2 = vector.load %arg3[%c0_3, %c1] : memref<8x4xf32, #tpu.memory_space<vmem>>, vector<8x1xf32>
    %c0_4 = arith.constant 0 : index
    %c2 = arith.constant 2 : index
    %3 = vector.load %arg3[%c0_4, %c2] : memref<8x4xf32, #tpu.memory_space<vmem>>, vector<8x1xf32>
    %c0_5 = arith.constant 0 : index
    %c3 = arith.constant 3 : index
    %4 = vector.load %arg3[%c0_5, %c3] : memref<8x4xf32, #tpu.memory_space<vmem>>, vector<8x1xf32>
    %c0_6 = arith.constant 0 : index
    %c0_7 = arith.constant 0 : index
    %c0_8 = arith.constant 0 : index
    %5 = vector.load %arg1[%c0_6, %c0_7, %c0_8] : memref<2x8x200xf32, #tpu.memory_space<vmem>>, vector<1x8x200xf32>
    %6 = vector.shape_cast %5 : vector<1x8x200xf32> to vector<8x200xf32>
    %c34_i32 = arith.constant 34 : i32
    %7 = tpu.dynamic_rotate %0 by %c34_i32 dim 1 : vector<8x256xf32>, i32 -> vector<8x256xf32>
    %c0_9 = arith.constant 0 : index
    %c0_10 = arith.constant 0 : index
    %8 = vector.load %arg2[%c0_9, %c0_10] : memref<25x256xf32, #tpu.memory_space<vmem>>, vector<1x256xf32>
    %9 = vector.broadcast %8 : vector<1x256xf32> to vector<8x256xf32>
    %10 = arith.mulf %7, %9 : vector<8x256xf32>
    %c0_11 = arith.constant 0 : index
    %c0_12 = arith.constant 0 : index
    %11 = vector.load %arg5[%c0_11, %c0_12] : memref<200x256xf32, #tpu.memory_space<vmem>>, vector<8x256xf32>
    tpu.vector_store %arg5[%c0_11, %c0_12], %10 {strides = array<i32>} : memref<200x256xf32, #tpu.memory_space<vmem>>, vector<8x256xf32>,
    %c33_i32 = arith.constant 33 : i32
    %12 = tpu.dynamic_rotate %0 by %c33_i32 dim 1 : vector<8x256xf32>, i32 -> vector<8x256xf32>
    %c1_13 = arith.constant 1 : index
    %c0_14 = arith.constant 0 : index
    %13 = vector.load %arg2[%c1_13, %c0_14] : memref<25x256xf32, #tpu.memory_space<vmem>>, vector<1x256xf32>
    %14 = vector.broadcast %13 : vector<1x256xf32> to vector<8x256xf32>
    %15 = arith.mulf %12, %14 : vector<8x256xf32>
    %c8 = arith.constant 8 : index
    %c0_15 = arith.constant 0 : index
    %16 = vector.load %arg5[%c8, %c0_15] : memref<200x256xf32, #tpu.memory_space<vmem>>, vector<8x256xf32>
    tpu.vector_store %arg5[%c8, %c0_15], %15 {strides = array<i32>} : memref<200x256xf32, #tpu.memory_space<vmem>>, vector<8x256xf32>,
    %c32_i32 = arith.constant 32 : i32
    %17 = tpu.dynamic_rotate %0 by %c32_i32 dim 1 : vector<8x256xf32>, i32 -> vector<8x256xf32>
    %c2_16 = arith.constant 2 : index
    %c0_17 = arith.constant 0 : index
    %18 = vector.load %arg2[%c2_16, %c0_17] : memref<25x256xf32, #tpu.memory_space<vmem>>, vector<1x256xf32>
    %19 = vector.broadcast %18 : vector<1x256xf32> to vector<8x256xf32>
    %20 = arith.mulf %17, %19 : vector<8x256xf32>
    %c16 = arith.constant 16 : index
    %c0_18 = arith.constant 0 : index
    %21 = vector.load %arg5[%c16, %c0_18] : memref<200x256xf32, #tpu.memory_space<vmem>>, vector<8x256xf32>
    tpu.vector_store %arg5[%c16, %c0_18], %20 {strides = array<i32>} : memref<200x256xf32, #tpu.memory_space<vmem>>, vector<8x256xf32>,
    %c31_i32 = arith.constant 31 : i32
    %22 = tpu.dynamic_rotate %0 by %c31_i32 dim 1 : vector<8x256xf32>, i32 -> vector<8x256xf32>
    %c3_19 = arith.constant 3 : index
    %c0_20 = arith.constant 0 : index
    %23 = vector.load %arg2[%c3_19, %c0_20] : memref<25x256xf32, #tpu.memory_space<vmem>>, vector<1x256xf32>
    %24 = vector.broadcast %23 : vector<1x256xf32> to vector<8x256xf32>
    %25 = arith.mulf %22, %24 : vector<8x256xf32>
    %c24 = arith.constant 24 : index
    %c0_21 = arith.constant 0 : index
    %26 = vector.load %arg5[%c24, %c0_21] : memref<200x256xf32, #tpu.memory_space<vmem>>, vector<8x256xf32>
    tpu.vector_store %arg5[%c24, %c0_21], %25 {strides = array<i32>} : memref<200x256xf32, #tpu.memory_space<vmem>>, vector<8x256xf32>,
    %c30_i32 = arith.constant 30 : i32
    %27 = tpu.dynamic_rotate %0 by %c30_i32 dim 1 : vector<8x256xf32>, i32 -> vector<8x256xf32>
    %c4 = arith.constant 4 : index
    %c0_22 = arith.constant 0 : index
    %28 = vector.load %arg2[%c4, %c0_22] : memref<25x256xf32, #tpu.memory_space<vmem>>, vector<1x256xf32>
    %29 = vector.broadcast %28 : vector<1x256xf32> to vector<8x256xf32>
    %30 = arith.mulf %27, %29 : vector<8x256xf32>
    %c32 = arith.constant 32 : index
    %c0_23 = arith.constant 0 : index
    %31 = vector.load %arg5[%c32, %c0_23] : memref<200x256xf32, #tpu.memory_space<vmem>>, vector<8x256xf32>
    tpu.vector_store %arg5[%c32, %c0_23], %30 {strides = array<i32>} : memref<200x256xf32, #tpu.memory_space<vmem>>, vector<8x256xf32>,
    %c18_i32 = arith.constant 18 : i32
    %32 = tpu.dynamic_rotate %0 by %c18_i32 dim 1 : vector<8x256xf32>, i32 -> vector<8x256xf32>
    %c5 = arith.constant 5 : index
    %c0_24 = arith.constant 0 : index
    %33 = vector.load %arg2[%c5, %c0_24] : memref<25x256xf32, #tpu.memory_space<vmem>>, vector<1x256xf32>
    %34 = vector.broadcast %33 : vector<1x256xf32> to vector<8x256xf32>
    %35 = arith.mulf %32, %34 : vector<8x256xf32>
    %c40 = arith.constant 40 : index
    %c0_25 = arith.constant 0 : index
    %36 = vector.load %arg5[%c40, %c0_25] : memref<200x256xf32, #tpu.memory_space<vmem>>, vector<8x256xf32>
    tpu.vector_store %arg5[%c40, %c0_25], %35 {strides = array<i32>} : memref<200x256xf32, #tpu.memory_space<vmem>>, vector<8x256xf32>,
    %c17_i32 = arith.constant 17 : i32
    %37 = tpu.dynamic_rotate %0 by %c17_i32 dim 1 : vector<8x256xf32>, i32 -> vector<8x256xf32>
    %c6 = arith.constant 6 : index
    %c0_26 = arith.constant 0 : index
    %38 = vector.load %arg2[%c6, %c0_26] : memref<25x256xf32, #tpu.memory_space<vmem>>, vector<1x256xf32>
    %39 = vector.broadcast %38 : vector<1x256xf32> to vector<8x256xf32>
    %40 = arith.mulf %37, %39 : vector<8x256xf32>
    %c48 = arith.constant 48 : index
    %c0_27 = arith.constant 0 : index
    %41 = vector.load %arg5[%c48, %c0_27] : memref<200x256xf32, #tpu.memory_space<vmem>>, vector<8x256xf32>
    tpu.vector_store %arg5[%c48, %c0_27], %40 {strides = array<i32>} : memref<200x256xf32, #tpu.memory_space<vmem>>, vector<8x256xf32>,
    %c16_i32 = arith.constant 16 : i32
    %42 = tpu.dynamic_rotate %0 by %c16_i32 dim 1 : vector<8x256xf32>, i32 -> vector<8x256xf32>
    %c7 = arith.constant 7 : index
    %c0_28 = arith.constant 0 : index
    %43 = vector.load %arg2[%c7, %c0_28] : memref<25x256xf32, #tpu.memory_space<vmem>>, vector<1x256xf32>
    %44 = vector.broadcast %43 : vector<1x256xf32> to vector<8x256xf32>
    %45 = arith.mulf %42, %44 : vector<8x256xf32>
    %c56 = arith.constant 56 : index
    %c0_29 = arith.constant 0 : index
    %46 = vector.load %arg5[%c56, %c0_29] : memref<200x256xf32, #tpu.memory_space<vmem>>, vector<8x256xf32>
    tpu.vector_store %arg5[%c56, %c0_29], %45 {strides = array<i32>} : memref<200x256xf32, #tpu.memory_space<vmem>>, vector<8x256xf32>,
    %c15_i32 = arith.constant 15 : i32
    %47 = tpu.dynamic_rotate %0 by %c15_i32 dim 1 : vector<8x256xf32>, i32 -> vector<8x256xf32>
    %c8_30 = arith.constant 8 : index
    %c0_31 = arith.constant 0 : index
    %48 = vector.load %arg2[%c8_30, %c0_31] : memref<25x256xf32, #tpu.memory_space<vmem>>, vector<1x256xf32>
    %49 = vector.broadcast %48 : vector<1x256xf32> to vector<8x256xf32>
    %50 = arith.mulf %47, %49 : vector<8x256xf32>
    %c64 = arith.constant 64 : index
    %c0_32 = arith.constant 0 : index
    %51 = vector.load %arg5[%c64, %c0_32] : memref<200x256xf32, #tpu.memory_space<vmem>>, vector<8x256xf32>
    tpu.vector_store %arg5[%c64, %c0_32], %50 {strides = array<i32>} : memref<200x256xf32, #tpu.memory_space<vmem>>, vector<8x256xf32>,
    %c14_i32 = arith.constant 14 : i32
    %52 = tpu.dynamic_rotate %0 by %c14_i32 dim 1 : vector<8x256xf32>, i32 -> vector<8x256xf32>
    %c9 = arith.constant 9 : index
    %c0_33 = arith.constant 0 : index
    %53 = vector.load %arg2[%c9, %c0_33] : memref<25x256xf32, #tpu.memory_space<vmem>>, vector<1x256xf32>
    %54 = vector.broadcast %53 : vector<1x256xf32> to vector<8x256xf32>
    %55 = arith.mulf %52, %54 : vector<8x256xf32>
    %c72 = arith.constant 72 : index
    %c0_34 = arith.constant 0 : index
    %56 = vector.load %arg5[%c72, %c0_34] : memref<200x256xf32, #tpu.memory_space<vmem>>, vector<8x256xf32>
    tpu.vector_store %arg5[%c72, %c0_34], %55 {strides = array<i32>} : memref<200x256xf32, #tpu.memory_space<vmem>>, vector<8x256xf32>,
    %c2_i32 = arith.constant 2 : i32
    %57 = tpu.dynamic_rotate %0 by %c2_i32 dim 1 : vector<8x256xf32>, i32 -> vector<8x256xf32>
    %c10 = arith.constant 10 : index
    %c0_35 = arith.constant 0 : index
    %58 = vector.load %arg2[%c10, %c0_35] : memref<25x256xf32, #tpu.memory_space<vmem>>, vector<1x256xf32>
    %59 = vector.broadcast %58 : vector<1x256xf32> to vector<8x256xf32>
    %60 = arith.mulf %57, %59 : vector<8x256xf32>
    %c80 = arith.constant 80 : index
    %c0_36 = arith.constant 0 : index
    %61 = vector.load %arg5[%c80, %c0_36] : memref<200x256xf32, #tpu.memory_space<vmem>>, vector<8x256xf32>
    tpu.vector_store %arg5[%c80, %c0_36], %60 {strides = array<i32>} : memref<200x256xf32, #tpu.memory_space<vmem>>, vector<8x256xf32>,
    %c1_i32 = arith.constant 1 : i32
    %62 = tpu.dynamic_rotate %0 by %c1_i32 dim 1 : vector<8x256xf32>, i32 -> vector<8x256xf32>
    %c11 = arith.constant 11 : index
    %c0_37 = arith.constant 0 : index
    %63 = vector.load %arg2[%c11, %c0_37] : memref<25x256xf32, #tpu.memory_space<vmem>>, vector<1x256xf32>
    %64 = vector.broadcast %63 : vector<1x256xf32> to vector<8x256xf32>
    %65 = arith.mulf %62, %64 : vector<8x256xf32>
    %c88 = arith.constant 88 : index
    %c0_38 = arith.constant 0 : index
    %66 = vector.load %arg5[%c88, %c0_38] : memref<200x256xf32, #tpu.memory_space<vmem>>, vector<8x256xf32>
    tpu.vector_store %arg5[%c88, %c0_38], %65 {strides = array<i32>} : memref<200x256xf32, #tpu.memory_space<vmem>>, vector<8x256xf32>,
    %c96 = arith.constant 96 : index
    %c0_39 = arith.constant 0 : index
    %67 = vector.load %arg5[%c96, %c0_39] : memref<200x256xf32, #tpu.memory_space<vmem>>, vector<8x256xf32>
    tpu.vector_store %arg5[%c96, %c0_39], %0 {strides = array<i32>} : memref<200x256xf32, #tpu.memory_space<vmem>>, vector<8x256xf32>,
    %c255_i32 = arith.constant 255 : i32
    %68 = tpu.dynamic_rotate %0 by %c255_i32 dim 1 : vector<8x256xf32>, i32 -> vector<8x256xf32>
    %c13 = arith.constant 13 : index
    %c0_40 = arith.constant 0 : index
    %69 = vector.load %arg2[%c13, %c0_40] : memref<25x256xf32, #tpu.memory_space<vmem>>, vector<1x256xf32>
    %70 = vector.broadcast %69 : vector<1x256xf32> to vector<8x256xf32>
    %71 = arith.mulf %68, %70 : vector<8x256xf32>
    %c104 = arith.constant 104 : index
    %c0_41 = arith.constant 0 : index
    %72 = vector.load %arg5[%c104, %c0_41] : memref<200x256xf32, #tpu.memory_space<vmem>>, vector<8x256xf32>
    tpu.vector_store %arg5[%c104, %c0_41], %71 {strides = array<i32>} : memref<200x256xf32, #tpu.memory_space<vmem>>, vector<8x256xf32>,
    %c254_i32 = arith.constant 254 : i32
    %73 = tpu.dynamic_rotate %0 by %c254_i32 dim 1 : vector<8x256xf32>, i32 -> vector<8x256xf32>
    %c14 = arith.constant 14 : index
    %c0_42 = arith.constant 0 : index
    %74 = vector.load %arg2[%c14, %c0_42] : memref<25x256xf32, #tpu.memory_space<vmem>>, vector<1x256xf32>
    %75 = vector.broadcast %74 : vector<1x256xf32> to vector<8x256xf32>
    %76 = arith.mulf %73, %75 : vector<8x256xf32>
    %c112 = arith.constant 112 : index
    %c0_43 = arith.constant 0 : index
    %77 = vector.load %arg5[%c112, %c0_43] : memref<200x256xf32, #tpu.memory_space<vmem>>, vector<8x256xf32>
    tpu.vector_store %arg5[%c112, %c0_43], %76 {strides = array<i32>} : memref<200x256xf32, #tpu.memory_space<vmem>>, vector<8x256xf32>,
    %c242_i32 = arith.constant 242 : i32
    %78 = tpu.dynamic_rotate %0 by %c242_i32 dim 1 : vector<8x256xf32>, i32 -> vector<8x256xf32>
    %c15 = arith.constant 15 : index
    %c0_44 = arith.constant 0 : index
    %79 = vector.load %arg2[%c15, %c0_44] : memref<25x256xf32, #tpu.memory_space<vmem>>, vector<1x256xf32>
    %80 = vector.broadcast %79 : vector<1x256xf32> to vector<8x256xf32>
    %81 = arith.mulf %78, %80 : vector<8x256xf32>
    %c120 = arith.constant 120 : index
    %c0_45 = arith.constant 0 : index
    %82 = vector.load %arg5[%c120, %c0_45] : memref<200x256xf32, #tpu.memory_space<vmem>>, vector<8x256xf32>
    tpu.vector_store %arg5[%c120, %c0_45], %81 {strides = array<i32>} : memref<200x256xf32, #tpu.memory_space<vmem>>, vector<8x256xf32>,
    %c241_i32 = arith.constant 241 : i32
    %83 = tpu.dynamic_rotate %0 by %c241_i32 dim 1 : vector<8x256xf32>, i32 -> vector<8x256xf32>
    %c16_46 = arith.constant 16 : index
    %c0_47 = arith.constant 0 : index
    %84 = vector.load %arg2[%c16_46, %c0_47] : memref<25x256xf32, #tpu.memory_space<vmem>>, vector<1x256xf32>
    %85 = vector.broadcast %84 : vector<1x256xf32> to vector<8x256xf32>
    %86 = arith.mulf %83, %85 : vector<8x256xf32>
    %c128 = arith.constant 128 : index
    %c0_48 = arith.constant 0 : index
    %87 = vector.load %arg5[%c128, %c0_48] : memref<200x256xf32, #tpu.memory_space<vmem>>, vector<8x256xf32>
    tpu.vector_store %arg5[%c128, %c0_48], %86 {strides = array<i32>} : memref<200x256xf32, #tpu.memory_space<vmem>>, vector<8x256xf32>,
    %c240_i32 = arith.constant 240 : i32
    %88 = tpu.dynamic_rotate %0 by %c240_i32 dim 1 : vector<8x256xf32>, i32 -> vector<8x256xf32>
    %c17 = arith.constant 17 : index
    %c0_49 = arith.constant 0 : index
    %89 = vector.load %arg2[%c17, %c0_49] : memref<25x256xf32, #tpu.memory_space<vmem>>, vector<1x256xf32>
    %90 = vector.broadcast %89 : vector<1x256xf32> to vector<8x256xf32>
    %91 = arith.mulf %88, %90 : vector<8x256xf32>
    %c136 = arith.constant 136 : index
    %c0_50 = arith.constant 0 : index
    %92 = vector.load %arg5[%c136, %c0_50] : memref<200x256xf32, #tpu.memory_space<vmem>>, vector<8x256xf32>
    tpu.vector_store %arg5[%c136, %c0_50], %91 {strides = array<i32>} : memref<200x256xf32, #tpu.memory_space<vmem>>, vector<8x256xf32>,
    %c239_i32 = arith.constant 239 : i32
    %93 = tpu.dynamic_rotate %0 by %c239_i32 dim 1 : vector<8x256xf32>, i32 -> vector<8x256xf32>
    %c18 = arith.constant 18 : index
    %c0_51 = arith.constant 0 : index
    %94 = vector.load %arg2[%c18, %c0_51] : memref<25x256xf32, #tpu.memory_space<vmem>>, vector<1x256xf32>
    %95 = vector.broadcast %94 : vector<1x256xf32> to vector<8x256xf32>
    %96 = arith.mulf %93, %95 : vector<8x256xf32>
    %c144 = arith.constant 144 : index
    %c0_52 = arith.constant 0 : index
    %97 = vector.load %arg5[%c144, %c0_52] : memref<200x256xf32, #tpu.memory_space<vmem>>, vector<8x256xf32>
    tpu.vector_store %arg5[%c144, %c0_52], %96 {strides = array<i32>} : memref<200x256xf32, #tpu.memory_space<vmem>>, vector<8x256xf32>,
    %c238_i32 = arith.constant 238 : i32
    %98 = tpu.dynamic_rotate %0 by %c238_i32 dim 1 : vector<8x256xf32>, i32 -> vector<8x256xf32>
    %c19 = arith.constant 19 : index
    %c0_53 = arith.constant 0 : index
    %99 = vector.load %arg2[%c19, %c0_53] : memref<25x256xf32, #tpu.memory_space<vmem>>, vector<1x256xf32>
    %100 = vector.broadcast %99 : vector<1x256xf32> to vector<8x256xf32>
    %101 = arith.mulf %98, %100 : vector<8x256xf32>
    %c152 = arith.constant 152 : index
    %c0_54 = arith.constant 0 : index
    %102 = vector.load %arg5[%c152, %c0_54] : memref<200x256xf32, #tpu.memory_space<vmem>>, vector<8x256xf32>
    tpu.vector_store %arg5[%c152, %c0_54], %101 {strides = array<i32>} : memref<200x256xf32, #tpu.memory_space<vmem>>, vector<8x256xf32>,
    %c226_i32 = arith.constant 226 : i32
    %103 = tpu.dynamic_rotate %0 by %c226_i32 dim 1 : vector<8x256xf32>, i32 -> vector<8x256xf32>
    %c20 = arith.constant 20 : index
    %c0_55 = arith.constant 0 : index
    %104 = vector.load %arg2[%c20, %c0_55] : memref<25x256xf32, #tpu.memory_space<vmem>>, vector<1x256xf32>
    %105 = vector.broadcast %104 : vector<1x256xf32> to vector<8x256xf32>
    %106 = arith.mulf %103, %105 : vector<8x256xf32>
    %c160 = arith.constant 160 : index
    %c0_56 = arith.constant 0 : index
    %107 = vector.load %arg5[%c160, %c0_56] : memref<200x256xf32, #tpu.memory_space<vmem>>, vector<8x256xf32>
    tpu.vector_store %arg5[%c160, %c0_56], %106 {strides = array<i32>} : memref<200x256xf32, #tpu.memory_space<vmem>>, vector<8x256xf32>,
    %c225_i32 = arith.constant 225 : i32
    %108 = tpu.dynamic_rotate %0 by %c225_i32 dim 1 : vector<8x256xf32>, i32 -> vector<8x256xf32>
    %c21 = arith.constant 21 : index
    %c0_57 = arith.constant 0 : index
    %109 = vector.load %arg2[%c21, %c0_57] : memref<25x256xf32, #tpu.memory_space<vmem>>, vector<1x256xf32>
    %110 = vector.broadcast %109 : vector<1x256xf32> to vector<8x256xf32>
    %111 = arith.mulf %108, %110 : vector<8x256xf32>
    %c168 = arith.constant 168 : index
    %c0_58 = arith.constant 0 : index
    %112 = vector.load %arg5[%c168, %c0_58] : memref<200x256xf32, #tpu.memory_space<vmem>>, vector<8x256xf32>
    tpu.vector_store %arg5[%c168, %c0_58], %111 {strides = array<i32>} : memref<200x256xf32, #tpu.memory_space<vmem>>, vector<8x256xf32>,
    %c224_i32 = arith.constant 224 : i32
    %113 = tpu.dynamic_rotate %0 by %c224_i32 dim 1 : vector<8x256xf32>, i32 -> vector<8x256xf32>
    %c22 = arith.constant 22 : index
    %c0_59 = arith.constant 0 : index
    %114 = vector.load %arg2[%c22, %c0_59] : memref<25x256xf32, #tpu.memory_space<vmem>>, vector<1x256xf32>
    %115 = vector.broadcast %114 : vector<1x256xf32> to vector<8x256xf32>
    %116 = arith.mulf %113, %115 : vector<8x256xf32>
    %c176 = arith.constant 176 : index
    %c0_60 = arith.constant 0 : index
    %117 = vector.load %arg5[%c176, %c0_60] : memref<200x256xf32, #tpu.memory_space<vmem>>, vector<8x256xf32>
    tpu.vector_store %arg5[%c176, %c0_60], %116 {strides = array<i32>} : memref<200x256xf32, #tpu.memory_space<vmem>>, vector<8x256xf32>,
    %c223_i32 = arith.constant 223 : i32
    %118 = tpu.dynamic_rotate %0 by %c223_i32 dim 1 : vector<8x256xf32>, i32 -> vector<8x256xf32>
    %c23 = arith.constant 23 : index
    %c0_61 = arith.constant 0 : index
    %119 = vector.load %arg2[%c23, %c0_61] : memref<25x256xf32, #tpu.memory_space<vmem>>, vector<1x256xf32>
    %120 = vector.broadcast %119 : vector<1x256xf32> to vector<8x256xf32>
    %121 = arith.mulf %118, %120 : vector<8x256xf32>
    %c184 = arith.constant 184 : index
    %c0_62 = arith.constant 0 : index
    %122 = vector.load %arg5[%c184, %c0_62] : memref<200x256xf32, #tpu.memory_space<vmem>>, vector<8x256xf32>
    tpu.vector_store %arg5[%c184, %c0_62], %121 {strides = array<i32>} : memref<200x256xf32, #tpu.memory_space<vmem>>, vector<8x256xf32>,
    %c222_i32 = arith.constant 222 : i32
    %123 = tpu.dynamic_rotate %0 by %c222_i32 dim 1 : vector<8x256xf32>, i32 -> vector<8x256xf32>
    %c24_63 = arith.constant 24 : index
    %c0_64 = arith.constant 0 : index
    %124 = vector.load %arg2[%c24_63, %c0_64] : memref<25x256xf32, #tpu.memory_space<vmem>>, vector<1x256xf32>
    %125 = vector.broadcast %124 : vector<1x256xf32> to vector<8x256xf32>
    %126 = arith.mulf %123, %125 : vector<8x256xf32>
    %c192 = arith.constant 192 : index
    %c0_65 = arith.constant 0 : index
    %127 = vector.load %arg5[%c192, %c0_65] : memref<200x256xf32, #tpu.memory_space<vmem>>, vector<8x256xf32>
    tpu.vector_store %arg5[%c192, %c0_65], %126 {strides = array<i32>} : memref<200x256xf32, #tpu.memory_space<vmem>>, vector<8x256xf32>,
    %c0_66 = arith.constant 0 : index
    %c0_67 = arith.constant 0 : index
    %128 = vector.load %arg5[%c0_66, %c0_67] : memref<200x256xf32, #tpu.memory_space<vmem>>, vector<200x256xf32>
    %cst = arith.constant dense<0.000000e+00> : vector<8x256xf32>
    %129 = tpu.matmul %6, %128, %cst {dimension_numbers = #tpu.dot_dimension_numbers<[1], [0], [0], [1], [0, 0, 1, 1], [], []>} : vector<8x200xf32>, vector<200x256xf32>, vector<8x256xf32> -> vector<8x256xf32>
    %cst_68 = arith.constant dense<0.000000e+00> : vector<8xf32>
    %130 = vector.multi_reduction <add>, %129, %cst_68 [1] : vector<8x256xf32> to vector<8xf32>
    %131 = vector.shape_cast %130 : vector<8xf32> to vector<8x1xf32>
    %132 = arith.mulf %129, %129 : vector<8x256xf32>
    %cst_69 = arith.constant dense<0.000000e+00> : vector<8xf32>
    %133 = vector.multi_reduction <add>, %132, %cst_69 [1] : vector<8x256xf32> to vector<8xf32>
    %134 = vector.shape_cast %133 : vector<8xf32> to vector<8x1xf32>
    %c4_i32 = arith.constant 4 : i32
    %135 = tpu.dynamic_rotate %131 by %c4_i32 dim 0 : vector<8x1xf32>, i32 -> vector<8x1xf32>
    %136 = arith.addf %131, %135 : vector<8x1xf32>
    %c4_i32_70 = arith.constant 4 : i32
    %137 = tpu.dynamic_rotate %134 by %c4_i32_70 dim 0 : vector<8x1xf32>, i32 -> vector<8x1xf32>
    %138 = arith.addf %134, %137 : vector<8x1xf32>
    %cst_71 = arith.constant 0.001953125 : f32
    %139 = vector.broadcast %cst_71 : f32 to vector<8x1xf32>
    %140 = arith.mulf %136, %139 : vector<8x1xf32>
    %cst_72 = arith.constant 0.001953125 : f32
    %141 = vector.broadcast %cst_72 : f32 to vector<8x1xf32>
    %142 = arith.mulf %138, %141 : vector<8x1xf32>
    %143 = arith.mulf %140, %140 : vector<8x1xf32>
    %144 = arith.subf %142, %143 : vector<8x1xf32>
    %cst_73 = arith.constant 0.000000e+00 : f32
    %145 = vector.broadcast %cst_73 : f32 to vector<8x1xf32>
    %146 = arith.maximumf %144, %145 : vector<8x1xf32>
    %cst_74 = arith.constant 9.99999974E-6 : f32
    %147 = vector.broadcast %cst_74 : f32 to vector<8x1xf32>
    %148 = arith.addf %146, %147 : vector<8x1xf32>
    %149 = math.rsqrt %148 : vector<8x1xf32>
    %150 = arith.mulf %1, %149 : vector<8x1xf32>
    %151 = arith.mulf %140, %150 : vector<8x1xf32>
    %152 = arith.subf %2, %151 : vector<8x1xf32>
    %153 = vector.broadcast %150 : vector<8x1xf32> to vector<8x256xf32>
    %154 = arith.mulf %129, %153 : vector<8x256xf32>
    %155 = vector.broadcast %152 : vector<8x1xf32> to vector<8x256xf32>
    %156 = arith.addf %154, %155 : vector<8x256xf32>
    %cst_75 = arith.constant 0.000000e+00 : f32
    %157 = vector.broadcast %cst_75 : f32 to vector<8x256xf32>
    %158 = arith.maximumf %156, %157 : vector<8x256xf32>
    %c1_76 = arith.constant 1 : index
    %c0_77 = arith.constant 0 : index
    %c0_78 = arith.constant 0 : index
    %159 = vector.load %arg1[%c1_76, %c0_77, %c0_78] : memref<2x8x200xf32, #tpu.memory_space<vmem>>, vector<1x8x200xf32>
    %160 = vector.shape_cast %159 : vector<1x8x200xf32> to vector<8x200xf32>
    %c34_i32_79 = arith.constant 34 : i32
    %161 = tpu.dynamic_rotate %158 by %c34_i32_79 dim 1 : vector<8x256xf32>, i32 -> vector<8x256xf32>
    %c0_80 = arith.constant 0 : index
    %c0_81 = arith.constant 0 : index
    %162 = vector.load %arg2[%c0_80, %c0_81] : memref<25x256xf32, #tpu.memory_space<vmem>>, vector<1x256xf32>
    %163 = vector.broadcast %162 : vector<1x256xf32> to vector<8x256xf32>
    %164 = arith.mulf %161, %163 : vector<8x256xf32>
    %c0_82 = arith.constant 0 : index
    %c0_83 = arith.constant 0 : index
    %165 = vector.load %arg5[%c0_82, %c0_83] : memref<200x256xf32, #tpu.memory_space<vmem>>, vector<8x256xf32>
    tpu.vector_store %arg5[%c0_82, %c0_83], %164 {strides = array<i32>} : memref<200x256xf32, #tpu.memory_space<vmem>>, vector<8x256xf32>,
    %c33_i32_84 = arith.constant 33 : i32
    %166 = tpu.dynamic_rotate %158 by %c33_i32_84 dim 1 : vector<8x256xf32>, i32 -> vector<8x256xf32>
    %c1_85 = arith.constant 1 : index
    %c0_86 = arith.constant 0 : index
    %167 = vector.load %arg2[%c1_85, %c0_86] : memref<25x256xf32, #tpu.memory_space<vmem>>, vector<1x256xf32>
    %168 = vector.broadcast %167 : vector<1x256xf32> to vector<8x256xf32>
    %169 = arith.mulf %166, %168 : vector<8x256xf32>
    %c8_87 = arith.constant 8 : index
    %c0_88 = arith.constant 0 : index
    %170 = vector.load %arg5[%c8_87, %c0_88] : memref<200x256xf32, #tpu.memory_space<vmem>>, vector<8x256xf32>
    tpu.vector_store %arg5[%c8_87, %c0_88], %169 {strides = array<i32>} : memref<200x256xf32, #tpu.memory_space<vmem>>, vector<8x256xf32>,
    %c32_i32_89 = arith.constant 32 : i32
    %171 = tpu.dynamic_rotate %158 by %c32_i32_89 dim 1 : vector<8x256xf32>, i32 -> vector<8x256xf32>
    %c2_90 = arith.constant 2 : index
    %c0_91 = arith.constant 0 : index
    %172 = vector.load %arg2[%c2_90, %c0_91] : memref<25x256xf32, #tpu.memory_space<vmem>>, vector<1x256xf32>
    %173 = vector.broadcast %172 : vector<1x256xf32> to vector<8x256xf32>
    %174 = arith.mulf %171, %173 : vector<8x256xf32>
    %c16_92 = arith.constant 16 : index
    %c0_93 = arith.constant 0 : index
    %175 = vector.load %arg5[%c16_92, %c0_93] : memref<200x256xf32, #tpu.memory_space<vmem>>, vector<8x256xf32>
    tpu.vector_store %arg5[%c16_92, %c0_93], %174 {strides = array<i32>} : memref<200x256xf32, #tpu.memory_space<vmem>>, vector<8x256xf32>,
    %c31_i32_94 = arith.constant 31 : i32
    %176 = tpu.dynamic_rotate %158 by %c31_i32_94 dim 1 : vector<8x256xf32>, i32 -> vector<8x256xf32>
    %c3_95 = arith.constant 3 : index
    %c0_96 = arith.constant 0 : index
    %177 = vector.load %arg2[%c3_95, %c0_96] : memref<25x256xf32, #tpu.memory_space<vmem>>, vector<1x256xf32>
    %178 = vector.broadcast %177 : vector<1x256xf32> to vector<8x256xf32>
    %179 = arith.mulf %176, %178 : vector<8x256xf32>
    %c24_97 = arith.constant 24 : index
    %c0_98 = arith.constant 0 : index
    %180 = vector.load %arg5[%c24_97, %c0_98] : memref<200x256xf32, #tpu.memory_space<vmem>>, vector<8x256xf32>
    tpu.vector_store %arg5[%c24_97, %c0_98], %179 {strides = array<i32>} : memref<200x256xf32, #tpu.memory_space<vmem>>, vector<8x256xf32>,
    %c30_i32_99 = arith.constant 30 : i32
    %181 = tpu.dynamic_rotate %158 by %c30_i32_99 dim 1 : vector<8x256xf32>, i32 -> vector<8x256xf32>
    %c4_100 = arith.constant 4 : index
    %c0_101 = arith.constant 0 : index
    %182 = vector.load %arg2[%c4_100, %c0_101] : memref<25x256xf32, #tpu.memory_space<vmem>>, vector<1x256xf32>
    %183 = vector.broadcast %182 : vector<1x256xf32> to vector<8x256xf32>
    %184 = arith.mulf %181, %183 : vector<8x256xf32>
    %c32_102 = arith.constant 32 : index
    %c0_103 = arith.constant 0 : index
    %185 = vector.load %arg5[%c32_102, %c0_103] : memref<200x256xf32, #tpu.memory_space<vmem>>, vector<8x256xf32>
    tpu.vector_store %arg5[%c32_102, %c0_103], %184 {strides = array<i32>} : memref<200x256xf32, #tpu.memory_space<vmem>>, vector<8x256xf32>,
    %c18_i32_104 = arith.constant 18 : i32
    %186 = tpu.dynamic_rotate %158 by %c18_i32_104 dim 1 : vector<8x256xf32>, i32 -> vector<8x256xf32>
    %c5_105 = arith.constant 5 : index
    %c0_106 = arith.constant 0 : index
    %187 = vector.load %arg2[%c5_105, %c0_106] : memref<25x256xf32, #tpu.memory_space<vmem>>, vector<1x256xf32>
    %188 = vector.broadcast %187 : vector<1x256xf32> to vector<8x256xf32>
    %189 = arith.mulf %186, %188 : vector<8x256xf32>
    %c40_107 = arith.constant 40 : index
    %c0_108 = arith.constant 0 : index
    %190 = vector.load %arg5[%c40_107, %c0_108] : memref<200x256xf32, #tpu.memory_space<vmem>>, vector<8x256xf32>
    tpu.vector_store %arg5[%c40_107, %c0_108], %189 {strides = array<i32>} : memref<200x256xf32, #tpu.memory_space<vmem>>, vector<8x256xf32>,
    %c17_i32_109 = arith.constant 17 : i32
    %191 = tpu.dynamic_rotate %158 by %c17_i32_109 dim 1 : vector<8x256xf32>, i32 -> vector<8x256xf32>
    %c6_110 = arith.constant 6 : index
    %c0_111 = arith.constant 0 : index
    %192 = vector.load %arg2[%c6_110, %c0_111] : memref<25x256xf32, #tpu.memory_space<vmem>>, vector<1x256xf32>
    %193 = vector.broadcast %192 : vector<1x256xf32> to vector<8x256xf32>
    %194 = arith.mulf %191, %193 : vector<8x256xf32>
    %c48_112 = arith.constant 48 : index
    %c0_113 = arith.constant 0 : index
    %195 = vector.load %arg5[%c48_112, %c0_113] : memref<200x256xf32, #tpu.memory_space<vmem>>, vector<8x256xf32>
    tpu.vector_store %arg5[%c48_112, %c0_113], %194 {strides = array<i32>} : memref<200x256xf32, #tpu.memory_space<vmem>>, vector<8x256xf32>,
    %c16_i32_114 = arith.constant 16 : i32
    %196 = tpu.dynamic_rotate %158 by %c16_i32_114 dim 1 : vector<8x256xf32>, i32 -> vector<8x256xf32>
    %c7_115 = arith.constant 7 : index
    %c0_116 = arith.constant 0 : index
    %197 = vector.load %arg2[%c7_115, %c0_116] : memref<25x256xf32, #tpu.memory_space<vmem>>, vector<1x256xf32>
    %198 = vector.broadcast %197 : vector<1x256xf32> to vector<8x256xf32>
    %199 = arith.mulf %196, %198 : vector<8x256xf32>
    %c56_117 = arith.constant 56 : index
    %c0_118 = arith.constant 0 : index
    %200 = vector.load %arg5[%c56_117, %c0_118] : memref<200x256xf32, #tpu.memory_space<vmem>>, vector<8x256xf32>
    tpu.vector_store %arg5[%c56_117, %c0_118], %199 {strides = array<i32>} : memref<200x256xf32, #tpu.memory_space<vmem>>, vector<8x256xf32>,
    %c15_i32_119 = arith.constant 15 : i32
    %201 = tpu.dynamic_rotate %158 by %c15_i32_119 dim 1 : vector<8x256xf32>, i32 -> vector<8x256xf32>
    %c8_120 = arith.constant 8 : index
    %c0_121 = arith.constant 0 : index
    %202 = vector.load %arg2[%c8_120, %c0_121] : memref<25x256xf32, #tpu.memory_space<vmem>>, vector<1x256xf32>
    %203 = vector.broadcast %202 : vector<1x256xf32> to vector<8x256xf32>
    %204 = arith.mulf %201, %203 : vector<8x256xf32>
    %c64_122 = arith.constant 64 : index
    %c0_123 = arith.constant 0 : index
    %205 = vector.load %arg5[%c64_122, %c0_123] : memref<200x256xf32, #tpu.memory_space<vmem>>, vector<8x256xf32>
    tpu.vector_store %arg5[%c64_122, %c0_123], %204 {strides = array<i32>} : memref<200x256xf32, #tpu.memory_space<vmem>>, vector<8x256xf32>,
    %c14_i32_124 = arith.constant 14 : i32
    %206 = tpu.dynamic_rotate %158 by %c14_i32_124 dim 1 : vector<8x256xf32>, i32 -> vector<8x256xf32>
    %c9_125 = arith.constant 9 : index
    %c0_126 = arith.constant 0 : index
    %207 = vector.load %arg2[%c9_125, %c0_126] : memref<25x256xf32, #tpu.memory_space<vmem>>, vector<1x256xf32>
    %208 = vector.broadcast %207 : vector<1x256xf32> to vector<8x256xf32>
    %209 = arith.mulf %206, %208 : vector<8x256xf32>
    %c72_127 = arith.constant 72 : index
    %c0_128 = arith.constant 0 : index
    %210 = vector.load %arg5[%c72_127, %c0_128] : memref<200x256xf32, #tpu.memory_space<vmem>>, vector<8x256xf32>
    tpu.vector_store %arg5[%c72_127, %c0_128], %209 {strides = array<i32>} : memref<200x256xf32, #tpu.memory_space<vmem>>, vector<8x256xf32>,
    %c2_i32_129 = arith.constant 2 : i32
    %211 = tpu.dynamic_rotate %158 by %c2_i32_129 dim 1 : vector<8x256xf32>, i32 -> vector<8x256xf32>
    %c10_130 = arith.constant 10 : index
    %c0_131 = arith.constant 0 : index
    %212 = vector.load %arg2[%c10_130, %c0_131] : memref<25x256xf32, #tpu.memory_space<vmem>>, vector<1x256xf32>
    %213 = vector.broadcast %212 : vector<1x256xf32> to vector<8x256xf32>
    %214 = arith.mulf %211, %213 : vector<8x256xf32>
    %c80_132 = arith.constant 80 : index
    %c0_133 = arith.constant 0 : index
    %215 = vector.load %arg5[%c80_132, %c0_133] : memref<200x256xf32, #tpu.memory_space<vmem>>, vector<8x256xf32>
    tpu.vector_store %arg5[%c80_132, %c0_133], %214 {strides = array<i32>} : memref<200x256xf32, #tpu.memory_space<vmem>>, vector<8x256xf32>,
    %c1_i32_134 = arith.constant 1 : i32
    %216 = tpu.dynamic_rotate %158 by %c1_i32_134 dim 1 : vector<8x256xf32>, i32 -> vector<8x256xf32>
    %c11_135 = arith.constant 11 : index
    %c0_136 = arith.constant 0 : index
    %217 = vector.load %arg2[%c11_135, %c0_136] : memref<25x256xf32, #tpu.memory_space<vmem>>, vector<1x256xf32>
    %218 = vector.broadcast %217 : vector<1x256xf32> to vector<8x256xf32>
    %219 = arith.mulf %216, %218 : vector<8x256xf32>
    %c88_137 = arith.constant 88 : index
    %c0_138 = arith.constant 0 : index
    %220 = vector.load %arg5[%c88_137, %c0_138] : memref<200x256xf32, #tpu.memory_space<vmem>>, vector<8x256xf32>
    tpu.vector_store %arg5[%c88_137, %c0_138], %219 {strides = array<i32>} : memref<200x256xf32, #tpu.memory_space<vmem>>, vector<8x256xf32>,
    %c96_139 = arith.constant 96 : index
    %c0_140 = arith.constant 0 : index
    %221 = vector.load %arg5[%c96_139, %c0_140] : memref<200x256xf32, #tpu.memory_space<vmem>>, vector<8x256xf32>
    tpu.vector_store %arg5[%c96_139, %c0_140], %158 {strides = array<i32>} : memref<200x256xf32, #tpu.memory_space<vmem>>, vector<8x256xf32>,
    %c255_i32_141 = arith.constant 255 : i32
    %222 = tpu.dynamic_rotate %158 by %c255_i32_141 dim 1 : vector<8x256xf32>, i32 -> vector<8x256xf32>
    %c13_142 = arith.constant 13 : index
    %c0_143 = arith.constant 0 : index
    %223 = vector.load %arg2[%c13_142, %c0_143] : memref<25x256xf32, #tpu.memory_space<vmem>>, vector<1x256xf32>
    %224 = vector.broadcast %223 : vector<1x256xf32> to vector<8x256xf32>
    %225 = arith.mulf %222, %224 : vector<8x256xf32>
    %c104_144 = arith.constant 104 : index
    %c0_145 = arith.constant 0 : index
    %226 = vector.load %arg5[%c104_144, %c0_145] : memref<200x256xf32, #tpu.memory_space<vmem>>, vector<8x256xf32>
    tpu.vector_store %arg5[%c104_144, %c0_145], %225 {strides = array<i32>} : memref<200x256xf32, #tpu.memory_space<vmem>>, vector<8x256xf32>,
    %c254_i32_146 = arith.constant 254 : i32
    %227 = tpu.dynamic_rotate %158 by %c254_i32_146 dim 1 : vector<8x256xf32>, i32 -> vector<8x256xf32>
    %c14_147 = arith.constant 14 : index
    %c0_148 = arith.constant 0 : index
    %228 = vector.load %arg2[%c14_147, %c0_148] : memref<25x256xf32, #tpu.memory_space<vmem>>, vector<1x256xf32>
    %229 = vector.broadcast %228 : vector<1x256xf32> to vector<8x256xf32>
    %230 = arith.mulf %227, %229 : vector<8x256xf32>
    %c112_149 = arith.constant 112 : index
    %c0_150 = arith.constant 0 : index
    %231 = vector.load %arg5[%c112_149, %c0_150] : memref<200x256xf32, #tpu.memory_space<vmem>>, vector<8x256xf32>
    tpu.vector_store %arg5[%c112_149, %c0_150], %230 {strides = array<i32>} : memref<200x256xf32, #tpu.memory_space<vmem>>, vector<8x256xf32>,
    %c242_i32_151 = arith.constant 242 : i32
    %232 = tpu.dynamic_rotate %158 by %c242_i32_151 dim 1 : vector<8x256xf32>, i32 -> vector<8x256xf32>
    %c15_152 = arith.constant 15 : index
    %c0_153 = arith.constant 0 : index
    %233 = vector.load %arg2[%c15_152, %c0_153] : memref<25x256xf32, #tpu.memory_space<vmem>>, vector<1x256xf32>
    %234 = vector.broadcast %233 : vector<1x256xf32> to vector<8x256xf32>
    %235 = arith.mulf %232, %234 : vector<8x256xf32>
    %c120_154 = arith.constant 120 : index
    %c0_155 = arith.constant 0 : index
    %236 = vector.load %arg5[%c120_154, %c0_155] : memref<200x256xf32, #tpu.memory_space<vmem>>, vector<8x256xf32>
    tpu.vector_store %arg5[%c120_154, %c0_155], %235 {strides = array<i32>} : memref<200x256xf32, #tpu.memory_space<vmem>>, vector<8x256xf32>,
    %c241_i32_156 = arith.constant 241 : i32
    %237 = tpu.dynamic_rotate %158 by %c241_i32_156 dim 1 : vector<8x256xf32>, i32 -> vector<8x256xf32>
    %c16_157 = arith.constant 16 : index
    %c0_158 = arith.constant 0 : index
    %238 = vector.load %arg2[%c16_157, %c0_158] : memref<25x256xf32, #tpu.memory_space<vmem>>, vector<1x256xf32>
    %239 = vector.broadcast %238 : vector<1x256xf32> to vector<8x256xf32>
    %240 = arith.mulf %237, %239 : vector<8x256xf32>
    %c128_159 = arith.constant 128 : index
    %c0_160 = arith.constant 0 : index
    %241 = vector.load %arg5[%c128_159, %c0_160] : memref<200x256xf32, #tpu.memory_space<vmem>>, vector<8x256xf32>
    tpu.vector_store %arg5[%c128_159, %c0_160], %240 {strides = array<i32>} : memref<200x256xf32, #tpu.memory_space<vmem>>, vector<8x256xf32>,
    %c240_i32_161 = arith.constant 240 : i32
    %242 = tpu.dynamic_rotate %158 by %c240_i32_161 dim 1 : vector<8x256xf32>, i32 -> vector<8x256xf32>
    %c17_162 = arith.constant 17 : index
    %c0_163 = arith.constant 0 : index
    %243 = vector.load %arg2[%c17_162, %c0_163] : memref<25x256xf32, #tpu.memory_space<vmem>>, vector<1x256xf32>
    %244 = vector.broadcast %243 : vector<1x256xf32> to vector<8x256xf32>
    %245 = arith.mulf %242, %244 : vector<8x256xf32>
    %c136_164 = arith.constant 136 : index
    %c0_165 = arith.constant 0 : index
    %246 = vector.load %arg5[%c136_164, %c0_165] : memref<200x256xf32, #tpu.memory_space<vmem>>, vector<8x256xf32>
    tpu.vector_store %arg5[%c136_164, %c0_165], %245 {strides = array<i32>} : memref<200x256xf32, #tpu.memory_space<vmem>>, vector<8x256xf32>,
    %c239_i32_166 = arith.constant 239 : i32
    %247 = tpu.dynamic_rotate %158 by %c239_i32_166 dim 1 : vector<8x256xf32>, i32 -> vector<8x256xf32>
    %c18_167 = arith.constant 18 : index
    %c0_168 = arith.constant 0 : index
    %248 = vector.load %arg2[%c18_167, %c0_168] : memref<25x256xf32, #tpu.memory_space<vmem>>, vector<1x256xf32>
    %249 = vector.broadcast %248 : vector<1x256xf32> to vector<8x256xf32>
    %250 = arith.mulf %247, %249 : vector<8x256xf32>
    %c144_169 = arith.constant 144 : index
    %c0_170 = arith.constant 0 : index
    %251 = vector.load %arg5[%c144_169, %c0_170] : memref<200x256xf32, #tpu.memory_space<vmem>>, vector<8x256xf32>
    tpu.vector_store %arg5[%c144_169, %c0_170], %250 {strides = array<i32>} : memref<200x256xf32, #tpu.memory_space<vmem>>, vector<8x256xf32>,
    %c238_i32_171 = arith.constant 238 : i32
    %252 = tpu.dynamic_rotate %158 by %c238_i32_171 dim 1 : vector<8x256xf32>, i32 -> vector<8x256xf32>
    %c19_172 = arith.constant 19 : index
    %c0_173 = arith.constant 0 : index
    %253 = vector.load %arg2[%c19_172, %c0_173] : memref<25x256xf32, #tpu.memory_space<vmem>>, vector<1x256xf32>
    %254 = vector.broadcast %253 : vector<1x256xf32> to vector<8x256xf32>
    %255 = arith.mulf %252, %254 : vector<8x256xf32>
    %c152_174 = arith.constant 152 : index
    %c0_175 = arith.constant 0 : index
    %256 = vector.load %arg5[%c152_174, %c0_175] : memref<200x256xf32, #tpu.memory_space<vmem>>, vector<8x256xf32>
    tpu.vector_store %arg5[%c152_174, %c0_175], %255 {strides = array<i32>} : memref<200x256xf32, #tpu.memory_space<vmem>>, vector<8x256xf32>,
    %c226_i32_176 = arith.constant 226 : i32
    %257 = tpu.dynamic_rotate %158 by %c226_i32_176 dim 1 : vector<8x256xf32>, i32 -> vector<8x256xf32>
    %c20_177 = arith.constant 20 : index
    %c0_178 = arith.constant 0 : index
    %258 = vector.load %arg2[%c20_177, %c0_178] : memref<25x256xf32, #tpu.memory_space<vmem>>, vector<1x256xf32>
    %259 = vector.broadcast %258 : vector<1x256xf32> to vector<8x256xf32>
    %260 = arith.mulf %257, %259 : vector<8x256xf32>
    %c160_179 = arith.constant 160 : index
    %c0_180 = arith.constant 0 : index
    %261 = vector.load %arg5[%c160_179, %c0_180] : memref<200x256xf32, #tpu.memory_space<vmem>>, vector<8x256xf32>
    tpu.vector_store %arg5[%c160_179, %c0_180], %260 {strides = array<i32>} : memref<200x256xf32, #tpu.memory_space<vmem>>, vector<8x256xf32>,
    %c225_i32_181 = arith.constant 225 : i32
    %262 = tpu.dynamic_rotate %158 by %c225_i32_181 dim 1 : vector<8x256xf32>, i32 -> vector<8x256xf32>
    %c21_182 = arith.constant 21 : index
    %c0_183 = arith.constant 0 : index
    %263 = vector.load %arg2[%c21_182, %c0_183] : memref<25x256xf32, #tpu.memory_space<vmem>>, vector<1x256xf32>
    %264 = vector.broadcast %263 : vector<1x256xf32> to vector<8x256xf32>
    %265 = arith.mulf %262, %264 : vector<8x256xf32>
    %c168_184 = arith.constant 168 : index
    %c0_185 = arith.constant 0 : index
    %266 = vector.load %arg5[%c168_184, %c0_185] : memref<200x256xf32, #tpu.memory_space<vmem>>, vector<8x256xf32>
    tpu.vector_store %arg5[%c168_184, %c0_185], %265 {strides = array<i32>} : memref<200x256xf32, #tpu.memory_space<vmem>>, vector<8x256xf32>,
    %c224_i32_186 = arith.constant 224 : i32
    %267 = tpu.dynamic_rotate %158 by %c224_i32_186 dim 1 : vector<8x256xf32>, i32 -> vector<8x256xf32>
    %c22_187 = arith.constant 22 : index
    %c0_188 = arith.constant 0 : index
    %268 = vector.load %arg2[%c22_187, %c0_188] : memref<25x256xf32, #tpu.memory_space<vmem>>, vector<1x256xf32>
    %269 = vector.broadcast %268 : vector<1x256xf32> to vector<8x256xf32>
    %270 = arith.mulf %267, %269 : vector<8x256xf32>
    %c176_189 = arith.constant 176 : index
    %c0_190 = arith.constant 0 : index
    %271 = vector.load %arg5[%c176_189, %c0_190] : memref<200x256xf32, #tpu.memory_space<vmem>>, vector<8x256xf32>
    tpu.vector_store %arg5[%c176_189, %c0_190], %270 {strides = array<i32>} : memref<200x256xf32, #tpu.memory_space<vmem>>, vector<8x256xf32>,
    %c223_i32_191 = arith.constant 223 : i32
    %272 = tpu.dynamic_rotate %158 by %c223_i32_191 dim 1 : vector<8x256xf32>, i32 -> vector<8x256xf32>
    %c23_192 = arith.constant 23 : index
    %c0_193 = arith.constant 0 : index
    %273 = vector.load %arg2[%c23_192, %c0_193] : memref<25x256xf32, #tpu.memory_space<vmem>>, vector<1x256xf32>
    %274 = vector.broadcast %273 : vector<1x256xf32> to vector<8x256xf32>
    %275 = arith.mulf %272, %274 : vector<8x256xf32>
    %c184_194 = arith.constant 184 : index
    %c0_195 = arith.constant 0 : index
    %276 = vector.load %arg5[%c184_194, %c0_195] : memref<200x256xf32, #tpu.memory_space<vmem>>, vector<8x256xf32>
    tpu.vector_store %arg5[%c184_194, %c0_195], %275 {strides = array<i32>} : memref<200x256xf32, #tpu.memory_space<vmem>>, vector<8x256xf32>,
    %c222_i32_196 = arith.constant 222 : i32
    %277 = tpu.dynamic_rotate %158 by %c222_i32_196 dim 1 : vector<8x256xf32>, i32 -> vector<8x256xf32>
    %c24_197 = arith.constant 24 : index
    %c0_198 = arith.constant 0 : index
    %278 = vector.load %arg2[%c24_197, %c0_198] : memref<25x256xf32, #tpu.memory_space<vmem>>, vector<1x256xf32>
    %279 = vector.broadcast %278 : vector<1x256xf32> to vector<8x256xf32>
    %280 = arith.mulf %277, %279 : vector<8x256xf32>
    %c192_199 = arith.constant 192 : index
    %c0_200 = arith.constant 0 : index
    %281 = vector.load %arg5[%c192_199, %c0_200] : memref<200x256xf32, #tpu.memory_space<vmem>>, vector<8x256xf32>
    tpu.vector_store %arg5[%c192_199, %c0_200], %280 {strides = array<i32>} : memref<200x256xf32, #tpu.memory_space<vmem>>, vector<8x256xf32>,
    %c0_201 = arith.constant 0 : index
    %c0_202 = arith.constant 0 : index
    %282 = vector.load %arg5[%c0_201, %c0_202] : memref<200x256xf32, #tpu.memory_space<vmem>>, vector<200x256xf32>
    %cst_203 = arith.constant dense<0.000000e+00> : vector<8x256xf32>
    %283 = tpu.matmul %160, %282, %cst_203 {dimension_numbers = #tpu.dot_dimension_numbers<[1], [0], [0], [1], [0, 0, 1, 1], [], []>} : vector<8x200xf32>, vector<200x256xf32>, vector<8x256xf32> -> vector<8x256xf32>
    %cst_204 = arith.constant dense<0.000000e+00> : vector<8xf32>
    %284 = vector.multi_reduction <add>, %283, %cst_204 [1] : vector<8x256xf32> to vector<8xf32>
    %285 = vector.shape_cast %284 : vector<8xf32> to vector<8x1xf32>
    %286 = arith.mulf %283, %283 : vector<8x256xf32>
    %cst_205 = arith.constant dense<0.000000e+00> : vector<8xf32>
    %287 = vector.multi_reduction <add>, %286, %cst_205 [1] : vector<8x256xf32> to vector<8xf32>
    %288 = vector.shape_cast %287 : vector<8xf32> to vector<8x1xf32>
    %c4_i32_206 = arith.constant 4 : i32
    %289 = tpu.dynamic_rotate %285 by %c4_i32_206 dim 0 : vector<8x1xf32>, i32 -> vector<8x1xf32>
    %290 = arith.addf %285, %289 : vector<8x1xf32>
    %c4_i32_207 = arith.constant 4 : i32
    %291 = tpu.dynamic_rotate %288 by %c4_i32_207 dim 0 : vector<8x1xf32>, i32 -> vector<8x1xf32>
    %292 = arith.addf %288, %291 : vector<8x1xf32>
    %cst_208 = arith.constant 0.001953125 : f32
    %293 = vector.broadcast %cst_208 : f32 to vector<8x1xf32>
    %294 = arith.mulf %290, %293 : vector<8x1xf32>
    %cst_209 = arith.constant 0.001953125 : f32
    %295 = vector.broadcast %cst_209 : f32 to vector<8x1xf32>
    %296 = arith.mulf %292, %295 : vector<8x1xf32>
    %297 = arith.mulf %294, %294 : vector<8x1xf32>
    %298 = arith.subf %296, %297 : vector<8x1xf32>
    %cst_210 = arith.constant 0.000000e+00 : f32
    %299 = vector.broadcast %cst_210 : f32 to vector<8x1xf32>
    %300 = arith.maximumf %298, %299 : vector<8x1xf32>
    %cst_211 = arith.constant 9.99999974E-6 : f32
    %301 = vector.broadcast %cst_211 : f32 to vector<8x1xf32>
    %302 = arith.addf %300, %301 : vector<8x1xf32>
    %303 = math.rsqrt %302 : vector<8x1xf32>
    %304 = arith.mulf %3, %303 : vector<8x1xf32>
    %305 = arith.mulf %294, %304 : vector<8x1xf32>
    %306 = arith.subf %4, %305 : vector<8x1xf32>
    %307 = vector.broadcast %304 : vector<8x1xf32> to vector<8x256xf32>
    %308 = arith.mulf %283, %307 : vector<8x256xf32>
    %309 = vector.broadcast %306 : vector<8x1xf32> to vector<8x256xf32>
    %310 = arith.addf %308, %309 : vector<8x256xf32>
    %cst_212 = arith.constant 0.000000e+00 : f32
    %311 = vector.broadcast %cst_212 : f32 to vector<8x256xf32>
    %312 = arith.maximumf %310, %311 : vector<8x256xf32>
    %313 = arith.addf %312, %0 : vector<8x256xf32>
    %c0_213 = arith.constant 0 : index
    %c0_214 = arith.constant 0 : index
    %314 = vector.load %arg4[%c0_213, %c0_214] : memref<8x256xf32, #tpu.memory_space<vmem>>, vector<8x256xf32>
    tpu.vector_store %arg4[%c0_213, %c0_214], %313 {strides = array<i32>} : memref<8x256xf32, #tpu.memory_space<vmem>>, vector<8x256xf32>,
    return
  }
}

</mosaic_0001>

<llo_original>
// kernel: basic_block.1
$region0: #{basic_block.1}
  #allocation0 [shape = 'u32[]', space=smem, size = 0x4, offset = 0x4, fixed_abs, tag = 'smem constant byte address 0x4 - core index']
  #allocation1 [shape = 'u32[72,128]{1,0:T(1,128)}', space=vmem, size = 0x9000, scoped, tag = 'internal scratch']
  #allocation2 [shape = 'f32[200,256]{1,0:T(8,128)}', space=vmem, size = 0x32000, scoped, tag = 'scratch operand']
  %s0 = inlined_call_operand.vmem [shape: f32[8,256], index: 0, kind: input, shape index: {}]
  %s1 = inlined_call_operand.vmem [shape: f32[2,8,200], index: 1, kind: input, shape index: {}]
  %s2 = inlined_call_operand.vmem [shape: f32[25,256], index: 2, kind: input, shape index: {}]
  %s3 = inlined_call_operand.vmem [shape: f32[8,4], index: 3, kind: input, shape index: {}]
  %s4 = inlined_call_operand.vmem [shape: f32[8,256], index: 4, kind: output, shape index: {}]
  %s5 = sld [smem:[#allocation0]]
  $region26: #{basic_block.1} parent=0
    _
  %s7 = ssub.s32 1, %s5
  %s8 = scalar_select 0, %s7, %s5
  // Predicated region
  $region2: #{basic_block.1} parent=0 // pred_check
    _
  $region3: #{basic_block.1} parent=0 // pred_check_branch
    %10 = sbr.rel (0) target = $region5
  $region4: #{basic_block.1} parent=0 // pred_region
    _
  $region5: #{basic_block.1} parent=0 // pred_fallthru
    _
  // Predicated region
  $region6: #{basic_block.1} parent=0 // pred_check
    _
  $region7: #{basic_block.1} parent=0 // pred_check_branch
    %12 = sbr.rel (0) target = $region9
  $region8: #{basic_block.1} parent=0 // pred_region
    _
  $region9: #{basic_block.1} parent=0 // pred_fallthru
    _
  // Predicated region
  $region10: #{basic_block.1} parent=0 // pred_check
    _
  $region11: #{basic_block.1} parent=0 // pred_check_branch
    %14 = sbr.rel (0) target = $region13
  $region12: #{basic_block.1} parent=0 // pred_region
    _
  $region13: #{basic_block.1} parent=0 // pred_fallthru
    _
  // Predicated region
  $region14: #{basic_block.1} parent=0 // pred_check
    _
  $region15: #{basic_block.1} parent=0 // pred_check_branch
    %16 = sbr.rel (0) target = $region17
  $region16: #{basic_block.1} parent=0 // pred_region
    _
  $region17: #{basic_block.1} parent=0 // pred_fallthru
    _
  %v17 = vld [vmem:[%s0] sm:$0xff]
  %v18 = vld [vmem:[%s0 + $0x8] sm:$0xff]
  %v19 = vld [vmem:[%s3] sm:$0xff]
  %v20 = vld [vmem:[%s1] sm:$0xff]
  %v21 = vld [vmem:[%s1 + $0x8] sm:$0xff]
  %22 = vrot.lane.b32.xlu0 %v17, 34
  %v23 = vpop.permute.xlu0 %22
  %24 = vrot.lane.b32.xlu0 %v18, 34
  %v25 = vpop.permute.xlu0 %24
  %v26 = vlaneseq
  %v27 = vand.u32 %v26, 127
  %vm28 = vcmp.lt.s32.totalorder %v27, 34
  %v29 = vsel %vm28, %v23, %v25
  %v30 = vsel %vm28, %v25, %v23
  %v31 = vld [vmem:[%s2] ss:$8 sm:$0x3]
  %v33 = vperm.slane %v31, 0
  %v34 = vperm.slane %v31, 1
  %v37 = vmul.f32 %v30, %v33
  %v38 = vmul.f32 %v29, %v34
  %39 = vst [vmem:[#allocation2] sm:$0xff] %v37
  %40 = vst [vmem:[#allocation2 + $0x8] sm:$0xff] %v38
  %41 = vrot.lane.b32.xlu0 %v17, 33
  %v42 = vpop.permute.xlu0 %41
  %43 = vrot.lane.b32.xlu0 %v18, 33
  %v44 = vpop.permute.xlu0 %43
  %vm45 = vcmp.lt.s32.totalorder %v27, 33
  %v46 = vsel %vm45, %v42, %v44
  %v47 = vsel %vm45, %v44, %v42
  %s48 = scalar_lea.vmem %s2, 1
  %v49 = vld [vmem:[%s48] ss:$8 sm:$0x3]
  %v51 = vperm.slane %v49, 0
  %v52 = vperm.slane %v49, 1
  %v55 = vmul.f32 %v47, %v51
  %v56 = vmul.f32 %v46, %v52
  %57 = vst [vmem:[#allocation2 + $0x10] sm:$0xff] %v55
  %58 = vst [vmem:[#allocation2 + $0x18] sm:$0xff] %v56
  %59 = vrot.lane.b32.xlu0 %v17, 32
  %v60 = vpop.permute.xlu0 %59
  %61 = vrot.lane.b32.xlu0 %v18, 32
  %v62 = vpop.permute.xlu0 %61
  %vm63 = vcmp.lt.s32.totalorder %v27, 32
  %v64 = vsel %vm63, %v60, %v62
  %v65 = vsel %vm63, %v62, %v60
  %s66 = scalar_lea.vmem %s2, 2
  %v67 = vld [vmem:[%s66] ss:$8 sm:$0x3]
  %v69 = vperm.slane %v67, 0
  %v70 = vperm.slane %v67, 1
  %v73 = vmul.f32 %v65, %v69
  %v74 = vmul.f32 %v64, %v70
  %75 = vst [vmem:[#allocation2 + $0x20] sm:$0xff] %v73
  %76 = vst [vmem:[#allocation2 + $0x28] sm:$0xff] %v74
  %77 = vrot.lane.b32.xlu0 %v17, 31
  %v78 = vpop.permute.xlu0 %77
  %79 = vrot.lane.b32.xlu0 %v18, 31
  %v80 = vpop.permute.xlu0 %79
  %vm81 = vcmp.lt.s32.totalorder %v27, 31
  %v82 = vsel %vm81, %v78, %v80
  %v83 = vsel %vm81, %v80, %v78
  %s84 = scalar_lea.vmem %s2, 3
  %v85 = vld [vmem:[%s84] ss:$8 sm:$0x3]
  %v87 = vperm.slane %v85, 0
  %v88 = vperm.slane %v85, 1
  %v91 = vmul.f32 %v83, %v87
  %v92 = vmul.f32 %v82, %v88
  %93 = vst [vmem:[#allocation2 + $0x30] sm:$0xff] %v91
  %94 = vst [vmem:[#allocation2 + $0x38] sm:$0xff] %v92
  %95 = vrot.lane.b32.xlu0 %v17, 30
  %v96 = vpop.permute.xlu0 %95
  %97 = vrot.lane.b32.xlu0 %v18, 30
  %v98 = vpop.permute.xlu0 %97
  %vm99 = vcmp.lt.s32.totalorder %v27, 30
  %v100 = vsel %vm99, %v96, %v98
  %v101 = vsel %vm99, %v98, %v96
  %s102 = scalar_lea.vmem %s2, 4
  %v103 = vld [vmem:[%s102] ss:$8 sm:$0x3]
  %v105 = vperm.slane %v103, 0
  %v106 = vperm.slane %v103, 1
  %v109 = vmul.f32 %v101, %v105
  %v110 = vmul.f32 %v100, %v106
  %111 = vst [vmem:[#allocation2 + $0x40] sm:$0xff] %v109
  %112 = vst [vmem:[#allocation2 + $0x48] sm:$0xff] %v110
  %113 = vrot.lane.b32.xlu0 %v17, 18
  %v114 = vpop.permute.xlu0 %113
  %115 = vrot.lane.b32.xlu0 %v18, 18
  %v116 = vpop.permute.xlu0 %115
  %vm117 = vcmp.lt.s32.totalorder %v27, 18
  %v118 = vsel %vm117, %v114, %v116
  %v119 = vsel %vm117, %v116, %v114
  %s120 = scalar_lea.vmem %s2, 5
  %v121 = vld [vmem:[%s120] ss:$8 sm:$0x3]
  %v123 = vperm.slane %v121, 0
  %v124 = vperm.slane %v121, 1
  %v127 = vmul.f32 %v119, %v123
  %v128 = vmul.f32 %v118, %v124
  %129 = vst [vmem:[#allocation2 + $0x50] sm:$0xff] %v127
  %130 = vst [vmem:[#allocation2 + $0x58] sm:$0xff] %v128
  %131 = vrot.lane.b32.xlu0 %v17, 17
  %v132 = vpop.permute.xlu0 %131
  %133 = vrot.lane.b32.xlu0 %v18, 17
  %v134 = vpop.permute.xlu0 %133
  %vm135 = vcmp.lt.s32.totalorder %v27, 17
  %v136 = vsel %vm135, %v132, %v134
  %v137 = vsel %vm135, %v134, %v132
  %s138 = scalar_lea.vmem %s2, 6
  %v139 = vld [vmem:[%s138] ss:$8 sm:$0x3]
  %v141 = vperm.slane %v139, 0
  %v142 = vperm.slane %v139, 1
  %v145 = vmul.f32 %v137, %v141
  %v146 = vmul.f32 %v136, %v142
  %147 = vst [vmem:[#allocation2 + $0x60] sm:$0xff] %v145
  %148 = vst [vmem:[#allocation2 + $0x68] sm:$0xff] %v146
  %149 = vrot.lane.b32.xlu0 %v17, 16
  %v150 = vpop.permute.xlu0 %149
  %151 = vrot.lane.b32.xlu0 %v18, 16
  %v152 = vpop.permute.xlu0 %151
  %vm153 = vcmp.lt.s32.totalorder %v27, 16
  %v154 = vsel %vm153, %v150, %v152
  %v155 = vsel %vm153, %v152, %v150
  %s156 = scalar_lea.vmem %s2, 7
  %v157 = vld [vmem:[%s156] ss:$8 sm:$0x3]
  %v159 = vperm.slane %v157, 0
  %v160 = vperm.slane %v157, 1
  %v163 = vmul.f32 %v155, %v159
  %v164 = vmul.f32 %v154, %v160
  %165 = vst [vmem:[#allocation2 + $0x70] sm:$0xff] %v163
  %166 = vst [vmem:[#allocation2 + $0x78] sm:$0xff] %v164
  %167 = vrot.lane.b32.xlu0 %v17, 15
  %v168 = vpop.permute.xlu0 %167
  %169 = vrot.lane.b32.xlu0 %v18, 15
  %v170 = vpop.permute.xlu0 %169
  %vm171 = vcmp.lt.s32.totalorder %v27, 15
  %v172 = vsel %vm171, %v168, %v170
  %v173 = vsel %vm171, %v170, %v168
  %s174 = scalar_lea.vmem %s2, 16
  %v175 = vld [vmem:[%s174] ss:$8 sm:$0x3]
  %v177 = vperm.slane %v175, 0
  %v178 = vperm.slane %v175, 1
  %v181 = vmul.f32 %v173, %v177
  %v182 = vmul.f32 %v172, %v178
  %183 = vst [vmem:[#allocation2 + $0x80] sm:$0xff] %v181
  %184 = vst [vmem:[#allocation2 + $0x88] sm:$0xff] %v182
  %185 = vrot.lane.b32.xlu0 %v17, 14
  %v186 = vpop.permute.xlu0 %185
  %187 = vrot.lane.b32.xlu0 %v18, 14
  %v188 = vpop.permute.xlu0 %187
  %vm189 = vcmp.lt.s32.totalorder %v27, 14
  %v190 = vsel %vm189, %v186, %v188
  %v191 = vsel %vm189, %v188, %v186
  %s192 = scalar_lea.vmem %s2, 17
  %v193 = vld [vmem:[%s192] ss:$8 sm:$0x3]
  %v195 = vperm.slane %v193, 0
  %v196 = vperm.slane %v193, 1
  %v199 = vmul.f32 %v191, %v195
  %v200 = vmul.f32 %v190, %v196
  %201 = vst [vmem:[#allocation2 + $0x90] sm:$0xff] %v199
  %202 = vst [vmem:[#allocation2 + $0x98] sm:$0xff] %v200
  %203 = vrot.lane.b32.xlu0 %v17, 2
  %v204 = vpop.permute.xlu0 %203
  %205 = vrot.lane.b32.xlu0 %v18, 2
  %v206 = vpop.permute.xlu0 %205
  %vm207 = vcmp.lt.s32.totalorder %v27, 2
  %v208 = vsel %vm207, %v204, %v206
  %v209 = vsel %vm207, %v206, %v204
  %s210 = scalar_lea.vmem %s2, 18
  %v211 = vld [vmem:[%s210] ss:$8 sm:$0x3]
  %v213 = vperm.slane %v211, 0
  %v214 = vperm.slane %v211, 1
  %v217 = vmul.f32 %v209, %v213
  %v218 = vmul.f32 %v208, %v214
  %219 = vst [vmem:[#allocation2 + $0xa0] sm:$0xff] %v217
  %220 = vst [vmem:[#allocation2 + $0xa8] sm:$0xff] %v218
  %221 = vrot.lane.b32.xlu0 %v17, 1
  %v222 = vpop.permute.xlu0 %221
  %223 = vrot.lane.b32.xlu0 %v18, 1
  %v224 = vpop.permute.xlu0 %223
  %vm225 = vcmp.lt.s32.totalorder %v27, 1
  %v226 = vsel %vm225, %v222, %v224
  %v227 = vsel %vm225, %v224, %v222
  %s228 = scalar_lea.vmem %s2, 19
  %v229 = vld [vmem:[%s228] ss:$8 sm:$0x3]
  %v231 = vperm.slane %v229, 0
  %v232 = vperm.slane %v229, 1
  %v235 = vmul.f32 %v227, %v231
  %v236 = vmul.f32 %v226, %v232
  %237 = vst [vmem:[#allocation2 + $0xb0] sm:$0xff] %v235
  %238 = vst [vmem:[#allocation2 + $0xb8] sm:$0xff] %v236
  %239 = vst [vmem:[#allocation2 + $0xc0] sm:$0xff] %v17
  %240 = vst [vmem:[#allocation2 + $0xc8] sm:$0xff] %v18
  %241 = vrot.lane.b32.xlu0 %v17, 127
  %v242 = vpop.permute.xlu0 %241
  %243 = vrot.lane.b32.xlu0 %v18, 127
  %v244 = vpop.permute.xlu0 %243
  %vm245 = vcmp.lt.s32.totalorder %v27, 127
  %v246 = vsel %vm245, %v242, %v244
  %v247 = vsel %vm245, %v244, %v242
  %s248 = scalar_lea.vmem %s2, 21
  %v249 = vld [vmem:[%s248] ss:$8 sm:$0x3]
  %v251 = vperm.slane %v249, 0
  %v252 = vperm.slane %v249, 1
  %v255 = vmul.f32 %v246, %v251
  %v256 = vmul.f32 %v247, %v252
  %257 = vst [vmem:[#allocation2 + $0xd0] sm:$0xff] %v255
  %258 = vst [vmem:[#allocation2 + $0xd8] sm:$0xff] %v256
  %259 = vrot.lane.b32.xlu0 %v17, 126
  %v260 = vpop.permute.xlu0 %259
  %261 = vrot.lane.b32.xlu0 %v18, 126
  %v262 = vpop.permute.xlu0 %261
  %vm263 = vcmp.lt.s32.totalorder %v27, 126
  %v264 = vsel %vm263, %v260, %v262
  %v265 = vsel %vm263, %v262, %v260
  %s266 = scalar_lea.vmem %s2, 22
  %v267 = vld [vmem:[%s266] ss:$8 sm:$0x3]
  %v269 = vperm.slane %v267, 0
  %v270 = vperm.slane %v267, 1
  %v273 = vmul.f32 %v264, %v269
  %v274 = vmul.f32 %v265, %v270
  %275 = vst [vmem:[#allocation2 + $0xe0] sm:$0xff] %v273
  %276 = vst [vmem:[#allocation2 + $0xe8] sm:$0xff] %v274
  %277 = vrot.lane.b32.xlu0 %v17, 114
  %v278 = vpop.permute.xlu0 %277
  %279 = vrot.lane.b32.xlu0 %v18, 114
  %v280 = vpop.permute.xlu0 %279
  %vm281 = vcmp.lt.s32.totalorder %v27, 114
  %v282 = vsel %vm281, %v278, %v280
  %v283 = vsel %vm281, %v280, %v278
  %s284 = scalar_lea.vmem %s2, 23
  %v285 = vld [vmem:[%s284] ss:$8 sm:$0x3]
  %v287 = vperm.slane %v285, 0
  %v288 = vperm.slane %v285, 1
  %v291 = vmul.f32 %v282, %v287
  %v292 = vmul.f32 %v283, %v288
  %293 = vst [vmem:[#allocation2 + $0xf0] sm:$0xff] %v291
  %294 = vst [vmem:[#allocation2 + $0xf8] sm:$0xff] %v292
  %295 = vrot.lane.b32.xlu0 %v17, 113
  %v296 = vpop.permute.xlu0 %295
  %297 = vrot.lane.b32.xlu0 %v18, 113
  %v298 = vpop.permute.xlu0 %297
  %vm299 = vcmp.lt.s32.totalorder %v27, 113
  %v300 = vsel %vm299, %v296, %v298
  %v301 = vsel %vm299, %v298, %v296
  %s302 = scalar_lea.vmem %s2, 32
  %v303 = vld [vmem:[%s302] ss:$8 sm:$0x3]
  %v305 = vperm.slane %v303, 0
  %v306 = vperm.slane %v303, 1
  %v309 = vmul.f32 %v300, %v305
  %v310 = vmul.f32 %v301, %v306
  %311 = vst [vmem:[#allocation2 + $0x100] sm:$0xff] %v309
  %312 = vst [vmem:[#allocation2 + $0x108] sm:$0xff] %v310
  %313 = vrot.lane.b32.xlu0 %v17, 112
  %v314 = vpop.permute.xlu0 %313
  %315 = vrot.lane.b32.xlu0 %v18, 112
  %v316 = vpop.permute.xlu0 %315
  %vm317 = vcmp.lt.s32.totalorder %v27, 112
  %v318 = vsel %vm317, %v314, %v316
  %v319 = vsel %vm317, %v316, %v314
  %s320 = scalar_lea.vmem %s2, 33
  %v321 = vld [vmem:[%s320] ss:$8 sm:$0x3]
  %v323 = vperm.slane %v321, 0
  %v324 = vperm.slane %v321, 1
  %v327 = vmul.f32 %v318, %v323
  %v328 = vmul.f32 %v319, %v324
  %329 = vst [vmem:[#allocation2 + $0x110] sm:$0xff] %v327
  %330 = vst [vmem:[#allocation2 + $0x118] sm:$0xff] %v328
  %331 = vrot.lane.b32.xlu0 %v17, 111
  %v332 = vpop.permute.xlu0 %331
  %333 = vrot.lane.b32.xlu0 %v18, 111
  %v334 = vpop.permute.xlu0 %333
  %vm335 = vcmp.lt.s32.totalorder %v27, 111
  %v336 = vsel %vm335, %v332, %v334
  %v337 = vsel %vm335, %v334, %v332
  %s338 = scalar_lea.vmem %s2, 34
  %v339 = vld [vmem:[%s338] ss:$8 sm:$0x3]
  %v341 = vperm.slane %v339, 0
  %v342 = vperm.slane %v339, 1
  %v345 = vmul.f32 %v336, %v341
  %v346 = vmul.f32 %v337, %v342
  %347 = vst [vmem:[#allocation2 + $0x120] sm:$0xff] %v345
  %348 = vst [vmem:[#allocation2 + $0x128] sm:$0xff] %v346
  %349 = vrot.lane.b32.xlu0 %v17, 110
  %v350 = vpop.permute.xlu0 %349
  %351 = vrot.lane.b32.xlu0 %v18, 110
  %v352 = vpop.permute.xlu0 %351
  %vm353 = vcmp.lt.s32.totalorder %v27, 110
  %v354 = vsel %vm353, %v350, %v352
  %v355 = vsel %vm353, %v352, %v350
  %s356 = scalar_lea.vmem %s2, 35
  %v357 = vld [vmem:[%s356] ss:$8 sm:$0x3]
  %v359 = vperm.slane %v357, 0
  %v360 = vperm.slane %v357, 1
  %v363 = vmul.f32 %v354, %v359
  %v364 = vmul.f32 %v355, %v360
  %365 = vst [vmem:[#allocation2 + $0x130] sm:$0xff] %v363
  %366 = vst [vmem:[#allocation2 + $0x138] sm:$0xff] %v364
  %367 = vrot.lane.b32.xlu0 %v17, 98
  %v368 = vpop.permute.xlu0 %367
  %369 = vrot.lane.b32.xlu0 %v18, 98
  %v370 = vpop.permute.xlu0 %369
  %vm371 = vcmp.lt.s32.totalorder %v27, 98
  %v372 = vsel %vm371, %v368, %v370
  %v373 = vsel %vm371, %v370, %v368
  %s374 = scalar_lea.vmem %s2, 36
  %v375 = vld [vmem:[%s374] ss:$8 sm:$0x3]
  %v377 = vperm.slane %v375, 0
  %v378 = vperm.slane %v375, 1
  %v381 = vmul.f32 %v372, %v377
  %v382 = vmul.f32 %v373, %v378
  %383 = vst [vmem:[#allocation2 + $0x140] sm:$0xff] %v381
  %384 = vst [vmem:[#allocation2 + $0x148] sm:$0xff] %v382
  %385 = vrot.lane.b32.xlu0 %v17, 97
  %v386 = vpop.permute.xlu0 %385
  %387 = vrot.lane.b32.xlu0 %v18, 97
  %v388 = vpop.permute.xlu0 %387
  %vm389 = vcmp.lt.s32.totalorder %v27, 97
  %v390 = vsel %vm389, %v386, %v388
  %v391 = vsel %vm389, %v388, %v386
  %s392 = scalar_lea.vmem %s2, 37
  %v393 = vld [vmem:[%s392] ss:$8 sm:$0x3]
  %v395 = vperm.slane %v393, 0
  %v396 = vperm.slane %v393, 1
  %v399 = vmul.f32 %v390, %v395
  %v400 = vmul.f32 %v391, %v396
  %401 = vst [vmem:[#allocation2 + $0x150] sm:$0xff] %v399
  %402 = vst [vmem:[#allocation2 + $0x158] sm:$0xff] %v400
  %403 = vrot.lane.b32.xlu0 %v17, 96
  %v404 = vpop.permute.xlu0 %403
  %405 = vrot.lane.b32.xlu0 %v18, 96
  %v406 = vpop.permute.xlu0 %405
  %vm407 = vcmp.lt.s32.totalorder %v27, 96
  %v408 = vsel %vm407, %v404, %v406
  %v409 = vsel %vm407, %v406, %v404
  %s410 = scalar_lea.vmem %s2, 38
  %v411 = vld [vmem:[%s410] ss:$8 sm:$0x3]
  %v413 = vperm.slane %v411, 0
  %v414 = vperm.slane %v411, 1
  %v417 = vmul.f32 %v408, %v413
  %v418 = vmul.f32 %v409, %v414
  %419 = vst [vmem:[#allocation2 + $0x160] sm:$0xff] %v417
  %420 = vst [vmem:[#allocation2 + $0x168] sm:$0xff] %v418
  %421 = vrot.lane.b32.xlu0 %v17, 95
  %v422 = vpop.permute.xlu0 %421
  %423 = vrot.lane.b32.xlu0 %v18, 95
  %v424 = vpop.permute.xlu0 %423
  %vm425 = vcmp.lt.s32.totalorder %v27, 95
  %v426 = vsel %vm425, %v422, %v424
  %v427 = vsel %vm425, %v424, %v422
  %s428 = scalar_lea.vmem %s2, 39
  %v429 = vld [vmem:[%s428] ss:$8 sm:$0x3]
  %v431 = vperm.slane %v429, 0
  %v432 = vperm.slane %v429, 1
  %v435 = vmul.f32 %v426, %v431
  %v436 = vmul.f32 %v427, %v432
  %437 = vst [vmem:[#allocation2 + $0x170] sm:$0xff] %v435
  %438 = vst [vmem:[#allocation2 + $0x178] sm:$0xff] %v436
  %439 = vrot.lane.b32.xlu0 %v17, 94
  %v440 = vpop.permute.xlu0 %439
  %441 = vrot.lane.b32.xlu0 %v18, 94
  %v442 = vpop.permute.xlu0 %441
  %vm443 = vcmp.lt.s32.totalorder %v27, 94
  %v444 = vsel %vm443, %v440, %v442
  %v445 = vsel %vm443, %v442, %v440
  %s446 = scalar_lea.vmem %s2, 48
  %v447 = vld [vmem:[%s446] ss:$8 sm:$0x3]
  %v449 = vperm.slane %v447, 0
  %v450 = vperm.slane %v447, 1
  %v453 = vmul.f32 %v444, %v449
  %v454 = vmul.f32 %v445, %v450
  %455 = vst [vmem:[#allocation2 + $0x180] sm:$0xff] %v453
  %456 = vst [vmem:[#allocation2 + $0x188] sm:$0xff] %v454
  %v457 = vld [vmem:[#allocation2] sm:$0xff]
  %v458 = vld [vmem:[#allocation2 + $0x8] sm:$0xff]
  %v459 = vld [vmem:[#allocation2 + $0x10] sm:$0xff]
  %v460 = vld [vmem:[#allocation2 + $0x18] sm:$0xff]
  %v461 = vld [vmem:[#allocation2 + $0x20] sm:$0xff]
  %v462 = vld [vmem:[#allocation2 + $0x28] sm:$0xff]
  %v463 = vld [vmem:[#allocation2 + $0x30] sm:$0xff]
  %v464 = vld [vmem:[#allocation2 + $0x38] sm:$0xff]
  %v465 = vld [vmem:[#allocation2 + $0x40] sm:$0xff]
  %v466 = vld [vmem:[#allocation2 + $0x48] sm:$0xff]
  %v467 = vld [vmem:[#allocation2 + $0x50] sm:$0xff]
  %v468 = vld [vmem:[#allocation2 + $0x58] sm:$0xff]
  %v469 = vld [vmem:[#allocation2 + $0x60] sm:$0xff]
  %v470 = vld [vmem:[#allocation2 + $0x68] sm:$0xff]
  %v471 = vld [vmem:[#allocation2 + $0x70] sm:$0xff]
  %v472 = vld [vmem:[#allocation2 + $0x78] sm:$0xff]
  %v473 = vld [vmem:[#allocation2 + $0x80] sm:$0xff]
  %v474 = vld [vmem:[#allocation2 + $0x88] sm:$0xff]
  %v475 = vld [vmem:[#allocation2 + $0x90] sm:$0xff]
  %v476 = vld [vmem:[#allocation2 + $0x98] sm:$0xff]
  %v477 = vld [vmem:[#allocation2 + $0xa0] sm:$0xff]
  %v478 = vld [vmem:[#allocation2 + $0xa8] sm:$0xff]
  %v479 = vld [vmem:[#allocation2 + $0xb0] sm:$0xff]
  %v480 = vld [vmem:[#allocation2 + $0xb8] sm:$0xff]
  %v481 = vld [vmem:[#allocation2 + $0xc0] sm:$0xff]
  %v482 = vld [vmem:[#allocation2 + $0xc8] sm:$0xff]
  %v483 = vld [vmem:[#allocation2 + $0xd0] sm:$0xff]
  %v484 = vld [vmem:[#allocation2 + $0xd8] sm:$0xff]
  %v485 = vld [vmem:[#allocation2 + $0xe0] sm:$0xff]
  %v486 = vld [vmem:[#allocation2 + $0xe8] sm:$0xff]
  %v487 = vld [vmem:[#allocation2 + $0xf0] sm:$0xff]
  %v488 = vld [vmem:[#allocation2 + $0xf8] sm:$0xff]
  %v489 = vld [vmem:[#allocation2 + $0x100] sm:$0xff]
  %v490 = vld [vmem:[#allocation2 + $0x108] sm:$0xff]
  %v491 = vld [vmem:[#allocation2 + $0x110] sm:$0xff]
  %v492 = vld [vmem:[#allocation2 + $0x118] sm:$0xff]
  %v493 = vld [vmem:[#allocation2 + $0x120] sm:$0xff]
  %v494 = vld [vmem:[#allocation2 + $0x128] sm:$0xff]
  %v495 = vld [vmem:[#allocation2 + $0x130] sm:$0xff]
  %v496 = vld [vmem:[#allocation2 + $0x138] sm:$0xff]
  %v497 = vld [vmem:[#allocation2 + $0x140] sm:$0xff]
  %v498 = vld [vmem:[#allocation2 + $0x148] sm:$0xff]
  %v499 = vld [vmem:[#allocation2 + $0x150] sm:$0xff]
  %v500 = vld [vmem:[#allocation2 + $0x158] sm:$0xff]
  %v501 = vld [vmem:[#allocation2 + $0x160] sm:$0xff]
  %v502 = vld [vmem:[#allocation2 + $0x168] sm:$0xff]
  %v503 = vld [vmem:[#allocation2 + $0x170] sm:$0xff]
  %v504 = vld [vmem:[#allocation2 + $0x178] sm:$0xff]
  %v505 = vld [vmem:[#allocation2 + $0x180] sm:$0xff]
  %v506 = vld [vmem:[#allocation2 + $0x188] sm:$0xff]
  %vm507 = vcmask 588800
  %v509 = vsel %vm507, %v21, 0
  %511 = vmatpush.msra.mxu0 %v487
  %512 = vmatpush.msra.mxu0 %v485
  %513 = vmatpush.msra.mxu0 %v483
  %514 = vmatpush.msra.mxu0 %v481
  %515 = vmatpush.msra.mxu0 %v479
  %516 = vmatpush.msra.mxu0 %v477
  %517 = vmatpush.msra.mxu0 %v475
  %518 = vmatpush.msra.mxu0 %v473
  %519 = vmatpush.msra.mxu0 %v471
  %520 = vmatpush.msra.mxu0 %v469
  %521 = vmatpush.msra.mxu0 %v467
  %522 = vmatpush.msra.mxu0 %v465
  %523 = vmatpush.msra.mxu0 %v463
  %524 = vmatpush.msra.mxu0 %v461
  %525 = vmatpush.msra.mxu0 %v459
  %526 = vmatpush.msra.mxu0 %v457
  %527 = vmatmul.f32.gmra.mxu0 %v20
  %v528 = vpop.f32.mrf.mxu0
  %v529 = vadd.f32 0.0, %v528
  %530 = vdwg.mxu0
  %531 = vmatpush.msra.mxu0 0.0
  %532 = vmatpush.msra.mxu0 0.0
  %533 = vmatpush.msra.mxu0 0.0
  %534 = vmatpush.msra.mxu0 0.0
  %535 = vmatpush.msra.mxu0 0.0
  %536 = vmatpush.msra.mxu0 0.0
  %537 = vmatpush.msra.mxu0 0.0
  %538 = vmatpush.msra.mxu0 %v505
  %539 = vmatpush.msra.mxu0 %v503
  %540 = vmatpush.msra.mxu0 %v501
  %541 = vmatpush.msra.mxu0 %v499
  %542 = vmatpush.msra.mxu0 %v497
  %543 = vmatpush.msra.mxu0 %v495
  %544 = vmatpush.msra.mxu0 %v493
  %545 = vmatpush.msra.mxu0 %v491
  %546 = vmatpush.msra.mxu0 %v489
  %547 = vmatmul.f32.gmra.mxu0 %v509
  %v548 = vpop.f32.mrf.mxu0
  %v549 = vadd.f32 %v529, %v548
  %550 = vdwg.mxu0
  %551 = vmatpush.msra.mxu0 %v488
  %552 = vmatpush.msra.mxu0 %v486
  %553 = vmatpush.msra.mxu0 %v484
  %554 = vmatpush.msra.mxu0 %v482
  %555 = vmatpush.msra.mxu0 %v480
  %556 = vmatpush.msra.mxu0 %v478
  %557 = vmatpush.msra.mxu0 %v476
  %558 = vmatpush.msra.mxu0 %v474
  %559 = vmatpush.msra.mxu0 %v472
  %560 = vmatpush.msra.mxu0 %v470
  %561 = vmatpush.msra.mxu0 %v468
  %562 = vmatpush.msra.mxu0 %v466
  %563 = vmatpush.msra.mxu0 %v464
  %564 = vmatpush.msra.mxu0 %v462
  %565 = vmatpush.msra.mxu0 %v460
  %566 = vmatpush.msra.mxu0 %v458
  %567 = vmatmul.f32.gmra.mxu0 %v20
  %v568 = vpop.f32.mrf.mxu0
  %v569 = vadd.f32 0.0, %v568
  %570 = vdwg.mxu0
  %571 = vmatpush.msra.mxu0 0.0
  %572 = vmatpush.msra.mxu0 0.0
  %573 = vmatpush.msra.mxu0 0.0
  %574 = vmatpush.msra.mxu0 0.0
  %575 = vmatpush.msra.mxu0 0.0
  %576 = vmatpush.msra.mxu0 0.0
  %577 = vmatpush.msra.mxu0 0.0
  %578 = vmatpush.msra.mxu0 %v506
  %579 = vmatpush.msra.mxu0 %v504
  %580 = vmatpush.msra.mxu0 %v502
  %581 = vmatpush.msra.mxu0 %v500
  %582 = vmatpush.msra.mxu0 %v498
  %583 = vmatpush.msra.mxu0 %v496
  %584 = vmatpush.msra.mxu0 %v494
  %585 = vmatpush.msra.mxu0 %v492
  %586 = vmatpush.msra.mxu0 %v490
  %587 = vmatmul.f32.gmra.mxu0 %v509
  %v588 = vpop.f32.mrf.mxu0
  %v589 = vadd.f32 %v569, %v588
  %590 = vdwg.mxu0
  %v591 = vadd.f32 %v549, %v589
  %592 = vadd.xlane.f32.xlu0 %v591
  %v593 = vpop.xlane.xlu0 %592
  %v594 = vmul.f32 %v549, %v549
  %v595 = vmul.f32 %v589, %v589
  %v596 = vadd.f32 %v594, %v595
  %597 = vadd.xlane.f32.xlu0 %v596
  %v598 = vpop.xlane.xlu0 %597
  %v599 = vrot.slane %v593, 4
  %v600 = vadd.f32 %v593, %v599
  %v601 = vrot.slane %v598, 4
  %v602 = vadd.f32 %v598, %v601
  %v603 = vmul.f32 %v600, 0.001953125
  %v604 = vmul.f32 %v602, 0.001953125
  %v605 = vmul.f32 %v603, %v603
  %v606 = vsub.f32 %v604, %v605
  %v607 = vmax.f32 %v606, 0.0
  %v608 = vadd.f32 %v607, 1e-05
  %v609 = vrsqrt.pop %v608
  %v610 = vmul.f32 %v609, %v608
  %v611 = vmul.f32 %v610, %v609
  %v612 = vmul.f32 0.5, %v611
  %v613 = vsub.f32 1.5, %v612
  %v614 = vmul.f32 %v609, %v613
  %vm615 = vweird.f32 %v608
  %vm616 = vweird.f32 %v609
  %vm617 = vmor %vm615, %vm616
  %v618 = vsel %vm617, %v609, %v614
  %v619 = vmul.f32 %v19, %v618
  %v620 = vmul.f32 %v603, %v619
  %622 = vrot.lane.b32.xlu0 %v620, 1
  %v623 = vpop.permute.xlu0 %622
  %v625 = vsub.f32 %v19, %v623
  %627 = vset.pattern.permute.xlu0 0
  %628 = vperm.xlu0 %627, %v619
  %v629 = vpop.permute.xlu0 %628
  %v631 = vmul.f32 %v549, %v629
  %v632 = vmul.f32 %v589, %v629
  %634 = vset.pattern.permute.xlu0 1
  %635 = vperm.xlu0 %634, %v625
  %v636 = vpop.permute.xlu0 %635
  %v638 = vadd.f32 %v631, %v636
  %v639 = vadd.f32 %v632, %v636
  %v640 = vmax.f32 %v638, 0.0
  %v641 = vmax.f32 %v639, 0.0
  %s642 = scalar_lea.vmem %s1, 16
  %v643 = vld [vmem:[%s642] sm:$0xff]
  %v644 = vld [vmem:[%s642 + $0x8] sm:$0xff]
  %645 = vrot.lane.b32.xlu0 %v640, 34
  %v646 = vpop.permute.xlu0 %645
  %647 = vrot.lane.b32.xlu0 %v641, 34
  %v648 = vpop.permute.xlu0 %647
  %v649 = vsel %vm28, %v646, %v648
  %v650 = vsel %vm28, %v648, %v646
  %v651 = vld [vmem:[%s2] ss:$8 sm:$0x3]
  %v653 = vperm.slane %v651, 0
  %v654 = vperm.slane %v651, 1
  %v657 = vmul.f32 %v650, %v653
  %v658 = vmul.f32 %v649, %v654
  %659 = vst [vmem:[#allocation2] sm:$0xff] %v657
  %660 = vst [vmem:[#allocation2 + $0x8] sm:$0xff] %v658
  %661 = vrot.lane.b32.xlu0 %v640, 33
  %v662 = vpop.permute.xlu0 %661
  %663 = vrot.lane.b32.xlu0 %v641, 33
  %v664 = vpop.permute.xlu0 %663
  %v665 = vsel %vm45, %v662, %v664
  %v666 = vsel %vm45, %v664, %v662
  %v667 = vld [vmem:[%s48] ss:$8 sm:$0x3]
  %v669 = vperm.slane %v667, 0
  %v670 = vperm.slane %v667, 1
  %v673 = vmul.f32 %v666, %v669
  %v674 = vmul.f32 %v665, %v670
  %675 = vst [vmem:[#allocation2 + $0x10] sm:$0xff] %v673
  %676 = vst [vmem:[#allocation2 + $0x18] sm:$0xff] %v674
  %677 = vrot.lane.b32.xlu0 %v640, 32
  %v678 = vpop.permute.xlu0 %677
  %679 = vrot.lane.b32.xlu0 %v641, 32
  %v680 = vpop.permute.xlu0 %679
  %v681 = vsel %vm63, %v678, %v680
  %v682 = vsel %vm63, %v680, %v678
  %v683 = vld [vmem:[%s66] ss:$8 sm:$0x3]
  %v685 = vperm.slane %v683, 0
  %v686 = vperm.slane %v683, 1
  %v689 = vmul.f32 %v682, %v685
  %v690 = vmul.f32 %v681, %v686
  %691 = vst [vmem:[#allocation2 + $0x20] sm:$0xff] %v689
  %692 = vst [vmem:[#allocation2 + $0x28] sm:$0xff] %v690
  %693 = vrot.lane.b32.xlu0 %v640, 31
  %v694 = vpop.permute.xlu0 %693
  %695 = vrot.lane.b32.xlu0 %v641, 31
  %v696 = vpop.permute.xlu0 %695
  %v697 = vsel %vm81, %v694, %v696
  %v698 = vsel %vm81, %v696, %v694
  %v699 = vld [vmem:[%s84] ss:$8 sm:$0x3]
  %v701 = vperm.slane %v699, 0
  %v702 = vperm.slane %v699, 1
  %v705 = vmul.f32 %v698, %v701
  %v706 = vmul.f32 %v697, %v702
  %707 = vst [vmem:[#allocation2 + $0x30] sm:$0xff] %v705
  %708 = vst [vmem:[#allocation2 + $0x38] sm:$0xff] %v706
  %709 = vrot.lane.b32.xlu0 %v640, 30
  %v710 = vpop.permute.xlu0 %709
  %711 = vrot.lane.b32.xlu0 %v641, 30
  %v712 = vpop.permute.xlu0 %711
  %v713 = vsel %vm99, %v710, %v712
  %v714 = vsel %vm99, %v712, %v710
  %v715 = vld [vmem:[%s102] ss:$8 sm:$0x3]
  %v717 = vperm.slane %v715, 0
  %v718 = vperm.slane %v715, 1
  %v721 = vmul.f32 %v714, %v717
  %v722 = vmul.f32 %v713, %v718
  %723 = vst [vmem:[#allocation2 + $0x40] sm:$0xff] %v721
  %724 = vst [vmem:[#allocation2 + $0x48] sm:$0xff] %v722
  %725 = vrot.lane.b32.xlu0 %v640, 18
  %v726 = vpop.permute.xlu0 %725
  %727 = vrot.lane.b32.xlu0 %v641, 18
  %v728 = vpop.permute.xlu0 %727
  %v729 = vsel %vm117, %v726, %v728
  %v730 = vsel %vm117, %v728, %v726
  %v731 = vld [vmem:[%s120] ss:$8 sm:$0x3]
  %v733 = vperm.slane %v731, 0
  %v734 = vperm.slane %v731, 1
  %v737 = vmul.f32 %v730, %v733
  %v738 = vmul.f32 %v729, %v734
  %739 = vst [vmem:[#allocation2 + $0x50] sm:$0xff] %v737
  %740 = vst [vmem:[#allocation2 + $0x58] sm:$0xff] %v738
  %741 = vrot.lane.b32.xlu0 %v640, 17
  %v742 = vpop.permute.xlu0 %741
  %743 = vrot.lane.b32.xlu0 %v641, 17
  %v744 = vpop.permute.xlu0 %743
  %v745 = vsel %vm135, %v742, %v744
  %v746 = vsel %vm135, %v744, %v742
  %v747 = vld [vmem:[%s138] ss:$8 sm:$0x3]
  %v749 = vperm.slane %v747, 0
  %v750 = vperm.slane %v747, 1
  %v753 = vmul.f32 %v746, %v749
  %v754 = vmul.f32 %v745, %v750
  %755 = vst [vmem:[#allocation2 + $0x60] sm:$0xff] %v753
  %756 = vst [vmem:[#allocation2 + $0x68] sm:$0xff] %v754
  %757 = vrot.lane.b32.xlu0 %v640, 16
  %v758 = vpop.permute.xlu0 %757
  %759 = vrot.lane.b32.xlu0 %v641, 16
  %v760 = vpop.permute.xlu0 %759
  %v761 = vsel %vm153, %v758, %v760
  %v762 = vsel %vm153, %v760, %v758
  %v763 = vld [vmem:[%s156] ss:$8 sm:$0x3]
  %v765 = vperm.slane %v763, 0
  %v766 = vperm.slane %v763, 1
  %v769 = vmul.f32 %v762, %v765
  %v770 = vmul.f32 %v761, %v766
  %771 = vst [vmem:[#allocation2 + $0x70] sm:$0xff] %v769
  %772 = vst [vmem:[#allocation2 + $0x78] sm:$0xff] %v770
  %773 = vrot.lane.b32.xlu0 %v640, 15
  %v774 = vpop.permute.xlu0 %773
  %775 = vrot.lane.b32.xlu0 %v641, 15
  %v776 = vpop.permute.xlu0 %775
  %v777 = vsel %vm171, %v774, %v776
  %v778 = vsel %vm171, %v776, %v774
  %v779 = vld [vmem:[%s174] ss:$8 sm:$0x3]
  %v781 = vperm.slane %v779, 0
  %v782 = vperm.slane %v779, 1
  %v785 = vmul.f32 %v778, %v781
  %v786 = vmul.f32 %v777, %v782
  %787 = vst [vmem:[#allocation2 + $0x80] sm:$0xff] %v785
  %788 = vst [vmem:[#allocation2 + $0x88] sm:$0xff] %v786
  %789 = vrot.lane.b32.xlu0 %v640, 14
  %v790 = vpop.permute.xlu0 %789
  %791 = vrot.lane.b32.xlu0 %v641, 14
  %v792 = vpop.permute.xlu0 %791
  %v793 = vsel %vm189, %v790, %v792
  %v794 = vsel %vm189, %v792, %v790
  %v795 = vld [vmem:[%s192] ss:$8 sm:$0x3]
  %v797 = vperm.slane %v795, 0
  %v798 = vperm.slane %v795, 1
  %v801 = vmul.f32 %v794, %v797
  %v802 = vmul.f32 %v793, %v798
  %803 = vst [vmem:[#allocation2 + $0x90] sm:$0xff] %v801
  %804 = vst [vmem:[#allocation2 + $0x98] sm:$0xff] %v802
  %805 = vrot.lane.b32.xlu0 %v640, 2
  %v806 = vpop.permute.xlu0 %805
  %807 = vrot.lane.b32.xlu0 %v641, 2
  %v808 = vpop.permute.xlu0 %807
  %v809 = vsel %vm207, %v806, %v808
  %v810 = vsel %vm207, %v808, %v806
  %v811 = vld [vmem:[%s210] ss:$8 sm:$0x3]
  %v813 = vperm.slane %v811, 0
  %v814 = vperm.slane %v811, 1
  %v817 = vmul.f32 %v810, %v813
  %v818 = vmul.f32 %v809, %v814
  %819 = vst [vmem:[#allocation2 + $0xa0] sm:$0xff] %v817
  %820 = vst [vmem:[#allocation2 + $0xa8] sm:$0xff] %v818
  %821 = vrot.lane.b32.xlu0 %v640, 1
  %v822 = vpop.permute.xlu0 %821
  %823 = vrot.lane.b32.xlu0 %v641, 1
  %v824 = vpop.permute.xlu0 %823
  %v825 = vsel %vm225, %v822, %v824
  %v826 = vsel %vm225, %v824, %v822
  %v827 = vld [vmem:[%s228] ss:$8 sm:$0x3]
  %v829 = vperm.slane %v827, 0
  %v830 = vperm.slane %v827, 1
  %v833 = vmul.f32 %v826, %v829
  %v834 = vmul.f32 %v825, %v830
  %835 = vst [vmem:[#allocation2 + $0xb0] sm:$0xff] %v833
  %836 = vst [vmem:[#allocation2 + $0xb8] sm:$0xff] %v834
  %837 = vst [vmem:[#allocation2 + $0xc0] sm:$0xff] %v640
  %838 = vst [vmem:[#allocation2 + $0xc8] sm:$0xff] %v641
  %839 = vrot.lane.b32.xlu0 %v640, 127
  %v840 = vpop.permute.xlu0 %839
  %841 = vrot.lane.b32.xlu0 %v641, 127
  %v842 = vpop.permute.xlu0 %841
  %v843 = vsel %vm245, %v840, %v842
  %v844 = vsel %vm245, %v842, %v840
  %v845 = vld [vmem:[%s248] ss:$8 sm:$0x3]
  %v847 = vperm.slane %v845, 0
  %v848 = vperm.slane %v845, 1
  %v851 = vmul.f32 %v843, %v847
  %v852 = vmul.f32 %v844, %v848
  %853 = vst [vmem:[#allocation2 + $0xd0] sm:$0xff] %v851
  %854 = vst [vmem:[#allocation2 + $0xd8] sm:$0xff] %v852
  %855 = vrot.lane.b32.xlu0 %v640, 126
  %v856 = vpop.permute.xlu0 %855
  %857 = vrot.lane.b32.xlu0 %v641, 126
  %v858 = vpop.permute.xlu0 %857
  %v859 = vsel %vm263, %v856, %v858
  %v860 = vsel %vm263, %v858, %v856
  %v861 = vld [vmem:[%s266] ss:$8 sm:$0x3]
  %v863 = vperm.slane %v861, 0
  %v864 = vperm.slane %v861, 1
  %v867 = vmul.f32 %v859, %v863
  %v868 = vmul.f32 %v860, %v864
  %869 = vst [vmem:[#allocation2 + $0xe0] sm:$0xff] %v867
  %870 = vst [vmem:[#allocation2 + $0xe8] sm:$0xff] %v868
  %871 = vrot.lane.b32.xlu0 %v640, 114
  %v872 = vpop.permute.xlu0 %871
  %873 = vrot.lane.b32.xlu0 %v641, 114
  %v874 = vpop.permute.xlu0 %873
  %v875 = vsel %vm281, %v872, %v874
  %v876 = vsel %vm281, %v874, %v872
  %v877 = vld [vmem:[%s284] ss:$8 sm:$0x3]
  %v879 = vperm.slane %v877, 0
  %v880 = vperm.slane %v877, 1
  %v883 = vmul.f32 %v875, %v879
  %v884 = vmul.f32 %v876, %v880
  %885 = vst [vmem:[#allocation2 + $0xf0] sm:$0xff] %v883
  %886 = vst [vmem:[#allocation2 + $0xf8] sm:$0xff] %v884
  %887 = vrot.lane.b32.xlu0 %v640, 113
  %v888 = vpop.permute.xlu0 %887
  %889 = vrot.lane.b32.xlu0 %v641, 113
  %v890 = vpop.permute.xlu0 %889
  %v891 = vsel %vm299, %v888, %v890
  %v892 = vsel %vm299, %v890, %v888
  %v893 = vld [vmem:[%s302] ss:$8 sm:$0x3]
  %v895 = vperm.slane %v893, 0
  %v896 = vperm.slane %v893, 1
  %v899 = vmul.f32 %v891, %v895
  %v900 = vmul.f32 %v892, %v896
  %901 = vst [vmem:[#allocation2 + $0x100] sm:$0xff] %v899
  %902 = vst [vmem:[#allocation2 + $0x108] sm:$0xff] %v900
  %903 = vrot.lane.b32.xlu0 %v640, 112
  %v904 = vpop.permute.xlu0 %903
  %905 = vrot.lane.b32.xlu0 %v641, 112
  %v906 = vpop.permute.xlu0 %905
  %v907 = vsel %vm317, %v904, %v906
  %v908 = vsel %vm317, %v906, %v904
  %v909 = vld [vmem:[%s320] ss:$8 sm:$0x3]
  %v911 = vperm.slane %v909, 0
  %v912 = vperm.slane %v909, 1
  %v915 = vmul.f32 %v907, %v911
  %v916 = vmul.f32 %v908, %v912
  %917 = vst [vmem:[#allocation2 + $0x110] sm:$0xff] %v915
  %918 = vst [vmem:[#allocation2 + $0x118] sm:$0xff] %v916
  %919 = vrot.lane.b32.xlu0 %v640, 111
  %v920 = vpop.permute.xlu0 %919
  %921 = vrot.lane.b32.xlu0 %v641, 111
  %v922 = vpop.permute.xlu0 %921
  %v923 = vsel %vm335, %v920, %v922
  %v924 = vsel %vm335, %v922, %v920
  %v925 = vld [vmem:[%s338] ss:$8 sm:$0x3]
  %v927 = vperm.slane %v925, 0
  %v928 = vperm.slane %v925, 1
  %v931 = vmul.f32 %v923, %v927
  %v932 = vmul.f32 %v924, %v928
  %933 = vst [vmem:[#allocation2 + $0x120] sm:$0xff] %v931
  %934 = vst [vmem:[#allocation2 + $0x128] sm:$0xff] %v932
  %935 = vrot.lane.b32.xlu0 %v640, 110
  %v936 = vpop.permute.xlu0 %935
  %937 = vrot.lane.b32.xlu0 %v641, 110
  %v938 = vpop.permute.xlu0 %937
  %v939 = vsel %vm353, %v936, %v938
  %v940 = vsel %vm353, %v938, %v936
  %v941 = vld [vmem:[%s356] ss:$8 sm:$0x3]
  %v943 = vperm.slane %v941, 0
  %v944 = vperm.slane %v941, 1
  %v947 = vmul.f32 %v939, %v943
  %v948 = vmul.f32 %v940, %v944
  %949 = vst [vmem:[#allocation2 + $0x130] sm:$0xff] %v947
  %950 = vst [vmem:[#allocation2 + $0x138] sm:$0xff] %v948
  %951 = vrot.lane.b32.xlu0 %v640, 98
  %v952 = vpop.permute.xlu0 %951
  %953 = vrot.lane.b32.xlu0 %v641, 98
  %v954 = vpop.permute.xlu0 %953
  %v955 = vsel %vm371, %v952, %v954
  %v956 = vsel %vm371, %v954, %v952
  %v957 = vld [vmem:[%s374] ss:$8 sm:$0x3]
  %v959 = vperm.slane %v957, 0
  %v960 = vperm.slane %v957, 1
  %v963 = vmul.f32 %v955, %v959
  %v964 = vmul.f32 %v956, %v960
  %965 = vst [vmem:[#allocation2 + $0x140] sm:$0xff] %v963
  %966 = vst [vmem:[#allocation2 + $0x148] sm:$0xff] %v964
  %967 = vrot.lane.b32.xlu0 %v640, 97
  %v968 = vpop.permute.xlu0 %967
  %969 = vrot.lane.b32.xlu0 %v641, 97
  %v970 = vpop.permute.xlu0 %969
  %v971 = vsel %vm389, %v968, %v970
  %v972 = vsel %vm389, %v970, %v968
  %v973 = vld [vmem:[%s392] ss:$8 sm:$0x3]
  %v975 = vperm.slane %v973, 0
  %v976 = vperm.slane %v973, 1
  %v979 = vmul.f32 %v971, %v975
  %v980 = vmul.f32 %v972, %v976
  %981 = vst [vmem:[#allocation2 + $0x150] sm:$0xff] %v979
  %982 = vst [vmem:[#allocation2 + $0x158] sm:$0xff] %v980
  %983 = vrot.lane.b32.xlu0 %v640, 96
  %v984 = vpop.permute.xlu0 %983
  %985 = vrot.lane.b32.xlu0 %v641, 96
  %v986 = vpop.permute.xlu0 %985
  %v987 = vsel %vm407, %v984, %v986
  %v988 = vsel %vm407, %v986, %v984
  %v989 = vld [vmem:[%s410] ss:$8 sm:$0x3]
  %v991 = vperm.slane %v989, 0
  %v992 = vperm.slane %v989, 1
  %v995 = vmul.f32 %v987, %v991
  %v996 = vmul.f32 %v988, %v992
  %997 = vst [vmem:[#allocation2 + $0x160] sm:$0xff] %v995
  %998 = vst [vmem:[#allocation2 + $0x168] sm:$0xff] %v996
  %999 = vrot.lane.b32.xlu0 %v640, 95
  %v1000 = vpop.permute.xlu0 %999
  %1001 = vrot.lane.b32.xlu0 %v641, 95
  %v1002 = vpop.permute.xlu0 %1001
  %v1003 = vsel %vm425, %v1000, %v1002
  %v1004 = vsel %vm425, %v1002, %v1000
  %v1005 = vld [vmem:[%s428] ss:$8 sm:$0x3]
  %v1007 = vperm.slane %v1005, 0
  %v1008 = vperm.slane %v1005, 1
  %v1011 = vmul.f32 %v1003, %v1007
  %v1012 = vmul.f32 %v1004, %v1008
  %1013 = vst [vmem:[#allocation2 + $0x170] sm:$0xff] %v1011
  %1014 = vst [vmem:[#allocation2 + $0x178] sm:$0xff] %v1012
  %1015 = vrot.lane.b32.xlu0 %v640, 94
  %v1016 = vpop.permute.xlu0 %1015
  %1017 = vrot.lane.b32.xlu0 %v641, 94
  %v1018 = vpop.permute.xlu0 %1017
  %v1019 = vsel %vm443, %v1016, %v1018
  %v1020 = vsel %vm443, %v1018, %v1016
  %v1021 = vld [vmem:[%s446] ss:$8 sm:$0x3]
  %v1023 = vperm.slane %v1021, 0
  %v1024 = vperm.slane %v1021, 1
  %v1027 = vmul.f32 %v1019, %v1023
  %v1028 = vmul.f32 %v1020, %v1024
  %1029 = vst [vmem:[#allocation2 + $0x180] sm:$0xff] %v1027
  %1030 = vst [vmem:[#allocation2 + $0x188] sm:$0xff] %v1028
  %v1031 = vld [vmem:[#allocation2] sm:$0xff]
  %v1032 = vld [vmem:[#allocation2 + $0x8] sm:$0xff]
  %v1033 = vld [vmem:[#allocation2 + $0x10] sm:$0xff]
  %v1034 = vld [vmem:[#allocation2 + $0x18] sm:$0xff]
  %v1035 = vld [vmem:[#allocation2 + $0x20] sm:$0xff]
  %v1036 = vld [vmem:[#allocation2 + $0x28] sm:$0xff]
  %v1037 = vld [vmem:[#allocation2 + $0x30] sm:$0xff]
  %v1038 = vld [vmem:[#allocation2 + $0x38] sm:$0xff]
  %v1039 = vld [vmem:[#allocation2 + $0x40] sm:$0xff]
  %v1040 = vld [vmem:[#allocation2 + $0x48] sm:$0xff]
  %v1041 = vld [vmem:[#allocation2 + $0x50] sm:$0xff]
  %v1042 = vld [vmem:[#allocation2 + $0x58] sm:$0xff]
  %v1043 = vld [vmem:[#allocation2 + $0x60] sm:$0xff]
  %v1044 = vld [vmem:[#allocation2 + $0x68] sm:$0xff]
  %v1045 = vld [vmem:[#allocation2 + $0x70] sm:$0xff]
  %v1046 = vld [vmem:[#allocation2 + $0x78] sm:$0xff]
  %v1047 = vld [vmem:[#allocation2 + $0x80] sm:$0xff]
  %v1048 = vld [vmem:[#allocation2 + $0x88] sm:$0xff]
  %v1049 = vld [vmem:[#allocation2 + $0x90] sm:$0xff]
  %v1050 = vld [vmem:[#allocation2 + $0x98] sm:$0xff]
  %v1051 = vld [vmem:[#allocation2 + $0xa0] sm:$0xff]
  %v1052 = vld [vmem:[#allocation2 + $0xa8] sm:$0xff]
  %v1053 = vld [vmem:[#allocation2 + $0xb0] sm:$0xff]
  %v1054 = vld [vmem:[#allocation2 + $0xb8] sm:$0xff]
  %v1055 = vld [vmem:[#allocation2 + $0xc0] sm:$0xff]
  %v1056 = vld [vmem:[#allocation2 + $0xc8] sm:$0xff]
  %v1057 = vld [vmem:[#allocation2 + $0xd0] sm:$0xff]
  %v1058 = vld [vmem:[#allocation2 + $0xd8] sm:$0xff]
  %v1059 = vld [vmem:[#allocation2 + $0xe0] sm:$0xff]
  %v1060 = vld [vmem:[#allocation2 + $0xe8] sm:$0xff]
  %v1061 = vld [vmem:[#allocation2 + $0xf0] sm:$0xff]
  %v1062 = vld [vmem:[#allocation2 + $0xf8] sm:$0xff]
  %v1063 = vld [vmem:[#allocation2 + $0x100] sm:$0xff]
  %v1064 = vld [vmem:[#allocation2 + $0x108] sm:$0xff]
  %v1065 = vld [vmem:[#allocation2 + $0x110] sm:$0xff]
  %v1066 = vld [vmem:[#allocation2 + $0x118] sm:$0xff]
  %v1067 = vld [vmem:[#allocation2 + $0x120] sm:$0xff]
  %v1068 = vld [vmem:[#allocation2 + $0x128] sm:$0xff]
  %v1069 = vld [vmem:[#allocation2 + $0x130] sm:$0xff]
  %v1070 = vld [vmem:[#allocation2 + $0x138] sm:$0xff]
  %v1071 = vld [vmem:[#allocation2 + $0x140] sm:$0xff]
  %v1072 = vld [vmem:[#allocation2 + $0x148] sm:$0xff]
  %v1073 = vld [vmem:[#allocation2 + $0x150] sm:$0xff]
  %v1074 = vld [vmem:[#allocation2 + $0x158] sm:$0xff]
  %v1075 = vld [vmem:[#allocation2 + $0x160] sm:$0xff]
  %v1076 = vld [vmem:[#allocation2 + $0x168] sm:$0xff]
  %v1077 = vld [vmem:[#allocation2 + $0x170] sm:$0xff]
  %v1078 = vld [vmem:[#allocation2 + $0x178] sm:$0xff]
  %v1079 = vld [vmem:[#allocation2 + $0x180] sm:$0xff]
  %v1080 = vld [vmem:[#allocation2 + $0x188] sm:$0xff]
  %v1082 = vsel %vm507, %v644, 0
  %1084 = vmatpush.msra.mxu0 %v1061
  %1085 = vmatpush.msra.mxu0 %v1059
  %1086 = vmatpush.msra.mxu0 %v1057
  %1087 = vmatpush.msra.mxu0 %v1055
  %1088 = vmatpush.msra.mxu0 %v1053
  %1089 = vmatpush.msra.mxu0 %v1051
  %1090 = vmatpush.msra.mxu0 %v1049
  %1091 = vmatpush.msra.mxu0 %v1047
  %1092 = vmatpush.msra.mxu0 %v1045
  %1093 = vmatpush.msra.mxu0 %v1043
  %1094 = vmatpush.msra.mxu0 %v1041
  %1095 = vmatpush.msra.mxu0 %v1039
  %1096 = vmatpush.msra.mxu0 %v1037
  %1097 = vmatpush.msra.mxu0 %v1035
  %1098 = vmatpush.msra.mxu0 %v1033
  %1099 = vmatpush.msra.mxu0 %v1031
  %1100 = vmatmul.f32.gmra.mxu0 %v643
  %v1101 = vpop.f32.mrf.mxu0
  %v1102 = vadd.f32 0.0, %v1101
  %1103 = vdwg.mxu0
  %1104 = vmatpush.msra.mxu0 0.0
  %1105 = vmatpush.msra.mxu0 0.0
  %1106 = vmatpush.msra.mxu0 0.0
  %1107 = vmatpush.msra.mxu0 0.0
  %1108 = vmatpush.msra.mxu0 0.0
  %1109 = vmatpush.msra.mxu0 0.0
  %1110 = vmatpush.msra.mxu0 0.0
  %1111 = vmatpush.msra.mxu0 %v1079
  %1112 = vmatpush.msra.mxu0 %v1077
  %1113 = vmatpush.msra.mxu0 %v1075
  %1114 = vmatpush.msra.mxu0 %v1073
  %1115 = vmatpush.msra.mxu0 %v1071
  %1116 = vmatpush.msra.mxu0 %v1069
  %1117 = vmatpush.msra.mxu0 %v1067
  %1118 = vmatpush.msra.mxu0 %v1065
  %1119 = vmatpush.msra.mxu0 %v1063
  %1120 = vmatmul.f32.gmra.mxu0 %v1082
  %v1121 = vpop.f32.mrf.mxu0
  %v1122 = vadd.f32 %v1102, %v1121
  %1123 = vdwg.mxu0
  %1124 = vmatpush.msra.mxu0 %v1062
  %1125 = vmatpush.msra.mxu0 %v1060
  %1126 = vmatpush.msra.mxu0 %v1058
  %1127 = vmatpush.msra.mxu0 %v1056
  %1128 = vmatpush.msra.mxu0 %v1054
  %1129 = vmatpush.msra.mxu0 %v1052
  %1130 = vmatpush.msra.mxu0 %v1050
  %1131 = vmatpush.msra.mxu0 %v1048
  %1132 = vmatpush.msra.mxu0 %v1046
  %1133 = vmatpush.msra.mxu0 %v1044
  %1134 = vmatpush.msra.mxu0 %v1042
  %1135 = vmatpush.msra.mxu0 %v1040
  %1136 = vmatpush.msra.mxu0 %v1038
  %1137 = vmatpush.msra.mxu0 %v1036
  %1138 = vmatpush.msra.mxu0 %v1034
  %1139 = vmatpush.msra.mxu0 %v1032
  %1140 = vmatmul.f32.gmra.mxu0 %v643
  %v1141 = vpop.f32.mrf.mxu0
  %v1142 = vadd.f32 0.0, %v1141
  %1143 = vdwg.mxu0
  %1144 = vmatpush.msra.mxu0 0.0
  %1145 = vmatpush.msra.mxu0 0.0
  %1146 = vmatpush.msra.mxu0 0.0
  %1147 = vmatpush.msra.mxu0 0.0
  %1148 = vmatpush.msra.mxu0 0.0
  %1149 = vmatpush.msra.mxu0 0.0
  %1150 = vmatpush.msra.mxu0 0.0
  %1151 = vmatpush.msra.mxu0 %v1080
  %1152 = vmatpush.msra.mxu0 %v1078
  %1153 = vmatpush.msra.mxu0 %v1076
  %1154 = vmatpush.msra.mxu0 %v1074
  %1155 = vmatpush.msra.mxu0 %v1072
  %1156 = vmatpush.msra.mxu0 %v1070
  %1157 = vmatpush.msra.mxu0 %v1068
  %1158 = vmatpush.msra.mxu0 %v1066
  %1159 = vmatpush.msra.mxu0 %v1064
  %1160 = vmatmul.f32.gmra.mxu0 %v1082
  %v1161 = vpop.f32.mrf.mxu0
  %v1162 = vadd.f32 %v1142, %v1161
  %1163 = vdwg.mxu0
  %v1164 = vadd.f32 %v1122, %v1162
  %1165 = vadd.xlane.f32.xlu0 %v1164
  %v1166 = vpop.xlane.xlu0 %1165
  %v1167 = vmul.f32 %v1122, %v1122
  %v1168 = vmul.f32 %v1162, %v1162
  %v1169 = vadd.f32 %v1167, %v1168
  %1170 = vadd.xlane.f32.xlu0 %v1169
  %v1171 = vpop.xlane.xlu0 %1170
  %v1172 = vrot.slane %v1166, 4
  %v1173 = vadd.f32 %v1166, %v1172
  %v1174 = vrot.slane %v1171, 4
  %v1175 = vadd.f32 %v1171, %v1174
  %v1176 = vmul.f32 %v1173, 0.001953125
  %v1177 = vmul.f32 %v1175, 0.001953125
  %v1178 = vmul.f32 %v1176, %v1176
  %v1179 = vsub.f32 %v1177, %v1178
  %v1180 = vmax.f32 %v1179, 0.0
  %v1181 = vadd.f32 %v1180, 1e-05
  %v1182 = vrsqrt.pop %v1181
  %v1183 = vmul.f32 %v1182, %v1181
  %v1184 = vmul.f32 %v1183, %v1182
  %v1185 = vmul.f32 0.5, %v1184
  %v1186 = vsub.f32 1.5, %v1185
  %v1187 = vmul.f32 %v1182, %v1186
  %vm1188 = vweird.f32 %v1181
  %vm1189 = vweird.f32 %v1182
  %vm1190 = vmor %vm1188, %vm1189
  %v1191 = vsel %vm1190, %v1182, %v1187
  %1193 = vrot.lane.b32.xlu0 %v1191, 2
  %v1194 = vpop.permute.xlu0 %1193
  %v1196 = vmul.f32 %v19, %v1194
  %1198 = vrot.lane.b32.xlu0 %v1196, 126
  %v1199 = vpop.permute.xlu0 %1198
  %v1201 = vmul.f32 %v1176, %v1199
  %1203 = vrot.lane.b32.xlu0 %v1201, 3
  %v1204 = vpop.permute.xlu0 %1203
  %v1206 = vsub.f32 %v19, %v1204
  %1207 = vset.pattern.permute.xlu0 2
  %1208 = vperm.xlu0 %1207, %v1196
  %v1209 = vpop.permute.xlu0 %1208
  %v1211 = vmul.f32 %v1122, %v1209
  %v1212 = vmul.f32 %v1162, %v1209
  %1214 = vset.pattern.permute.xlu0 3
  %1215 = vperm.xlu0 %1214, %v1206
  %v1216 = vpop.permute.xlu0 %1215
  %v1218 = vadd.f32 %v1211, %v1216
  %v1219 = vadd.f32 %v1212, %v1216
  %v1220 = vmax.f32 %v1218, 0.0
  %v1221 = vmax.f32 %v1219, 0.0
  %v1222 = vadd.f32 %v1220, %v17
  %v1223 = vadd.f32 %v1221, %v18
  %1224 = vst [vmem:[%s4] sm:$0xff] %v1222
  %1225 = vst [vmem:[%s4 + $0x8] sm:$0xff] %v1223
  // Predicated region
  $region18: #{basic_block.1} parent=0 // pred_check
    _
  $region19: #{basic_block.1} parent=0 // pred_check_branch
    %1227 = sbr.rel (0) target = $region21
  $region20: #{basic_block.1} parent=0 // pred_region
    _
  $region21: #{basic_block.1} parent=0 // pred_fallthru
    _
  // Predicated region
  $region22: #{basic_block.1} parent=0 // pred_check
    _
  $region23: #{basic_block.1} parent=0 // pred_check_branch
    %1229 = sbr.rel (0) target = $region25
  $region24: #{basic_block.1} parent=0 // pred_region
    _
  $region25: #{basic_block.1} parent=0 // pred_fallthru
    _

</llo_original>
